<compile_context>
chip_gen: v5e
topology: v5e:2x2
jax: 0.10.0
libtpu: 0.0.40
codegen_flags: <defaults>
</compile_context>

<pallas_src>
import functools

import jax
import jax.numpy as jnp
from jax import lax
from jax.experimental import pallas as pl
from jax.experimental.pallas import tpu as pltpu

BN_EPS = 1e-5  # PyTorch BatchNorm2d default

# Per-buffer row-tile budget for the stats reduction (double-buffered by the
# Pallas pipeline -> 2x this live).  8-16 MiB tiles already sit on the HBM
# roofline; scoped limit below stays under v7x's 64 MiB physical VMEM while
# leaving headroom on v5e/v6e (128 MiB physical).
VMEM_BUDGET_BYTES = 16 * 1024 * 1024
VMEM_LIMIT_BYTES = 48 * 1024 * 1024


# ----------------------------- Pallas kernels ------------------------------ #

def _bn_stats_kernel(x_ref, sum_ref, sq_ref):
    """Per-tile partial sum / sum-of-squares of a lane-packed activation."""
    x = x_ref[...]                                     # (tm, L) lane-dense
    sum_ref[...] = jnp.sum(x, axis=0, keepdims=True)   # (1, L)
    sq_ref[...] = jnp.sum(x * x, axis=0, keepdims=True)


def _conv1_bn_kernel(x_ref, scale_ref, shift_ref, w_ref, b_ref,
                     f1_ref, psum_ref, psq_ref):
    """conv1 (3x3, stride 2) with BN1-apply+ReLU fused on the input taps and
    BN2 partial statistics fused on the output.  One image per grid step.

    x_ref: W-polyphased padded input, shape ((H+2)*2, Wq, Cin) where
           row = 2*h_padded + w_phase and Wq = (W+2)//2.
    """
    Ho, Wo, Cout = f1_ref.shape
    scale = scale_ref[...]          # (1, Cin)
    shift = shift_ref[...]
    bias = b_ref[...]               # (1, Cout)
    w = w_ref[...]                  # (9, Cin, Cout)

    psum_ref[...] = jnp.zeros_like(psum_ref)
    psq_ref[...] = jnp.zeros_like(psq_ref)

    @pl.loop(0, Ho)
    def _(ho):
        acc = jnp.zeros((Wo, Cout), jnp.float32)
        for kh in range(3):
            for kw in range(3):
                # padded row 2*ho + kh, W-phase kw % 2, W-block offset kw // 2
                row = (2 * ho + kh) * 2 + (kw % 2)
                off = kw // 2
                tap = x_ref[row, off:off + Wo, :]                 # (Wo, Cin)
                tap = jnp.maximum(tap * scale + shift, 0.0)       # fused BN1+ReLU
                acc = acc + jnp.dot(tap, w[kh * 3 + kw],
                                    preferred_element_type=jnp.float32)
        y = acc + bias
        f1_ref[ho] = y
        psum_ref[...] += jnp.sum(y, axis=0, keepdims=True)        # fused BN2 stats
        psq_ref[...] += jnp.sum(y * y, axis=0, keepdims=True)


def _conv2_skip_kernel(g_ref, scale_ref, shift_ref, w2_ref, xs_ref, wout_ref,
                       b_ref, o_ref):
    """conv2 (3x3, stride 1) with BN2-apply+ReLU fused on the input taps plus
    the 1x1-stride-2 skip path, all accumulated in one kernel per image."""
    Ho, Wo, Cout = o_ref.shape
    scale = scale_ref[...]          # (1, Cout)
    shift = shift_ref[...]
    bias = b_ref[...]               # (1, Cout) = b2 + b_out
    w2 = w2_ref[...]                # (9, Cout, Cout)
    wout = wout_ref[...]            # (Cin, Cout)

    @pl.loop(0, Ho)
    def _(ho):
        # skip path: x[2ho, 2wo, :] @ w_out
        acc = jnp.dot(xs_ref[ho], wout, preferred_element_type=jnp.float32)
        for kh in range(3):
            for kw in range(3):
                tap = g_ref[ho + kh, kw:kw + Wo, :]               # (Wo, Cout)
                tap = jnp.maximum(tap * scale + shift, 0.0)       # fused BN2+ReLU
                acc = acc + jnp.dot(tap, w2[kh * 3 + kw],
                                    preferred_element_type=jnp.float32)
        o_ref[ho] = acc + bias


# ----------------------------- tiling helpers ------------------------------- #

def _choose_tm(M, bytes_per_row, max_rows):
    """Largest row tile (multiple of 8, divides M) within the VMEM budget."""
    cap = VMEM_BUDGET_BYTES // max(1, 2 * bytes_per_row)   # 2x: double-buffering
    cap = int(max(8, min(cap, max_rows, M)))
    if M <= cap:
        return M
    t = (cap // 8) * 8
    while t >= 8:
        if M % t == 0:
            return t
        t -= 8
    return M  # fallback: single full tile (always legal)


def _compiler_params():
    return pltpu.CompilerParams(dimension_semantics=("parallel",),
                                vmem_limit_bytes=VMEM_LIMIT_BYTES)


# ----------------------------- Pallas wrappers ------------------------------ #

def bn_channel_stats(x2d, max_rows):
    """Per-channel sum / sum-of-squares via a lane-packed parallel reduction."""
    M, C = x2d.shape
    r = 128 // C if (C <= 128 and 128 % C == 0 and M % max(1, 128 // C) == 0) else 1
    L = r * C
    Mr = M // r
    xw = x2d.reshape(Mr, L)                       # lane-dense no-copy view
    tm = _choose_tm(Mr, L * 4, max_rows)
    nt = Mr // tm
    sums, sqs = pl.pallas_call(
        _bn_stats_kernel,
        out_shape=(jax.ShapeDtypeStruct((nt, 1, L), jnp.float32),
                   jax.ShapeDtypeStruct((nt, 1, L), jnp.float32)),
        grid=(nt,),
        in_specs=[pl.BlockSpec((tm, L), lambda i: (i, 0))],
        out_specs=(pl.BlockSpec((None, 1, L), lambda i: (i, 0, 0)),
                   pl.BlockSpec((None, 1, L), lambda i: (i, 0, 0))),
        compiler_params=_compiler_params(),
    )(xw)
    s = sums.sum(axis=(0, 1)).reshape(r, C).sum(axis=0)
    q = sqs.sum(axis=(0, 1)).reshape(r, C).sum(axis=0)
    return s, q


def conv1_bn_fused(xpp, scale1, shift1, w1, b1, Ho, Wo):
    N, HP2, Wq, Cin = xpp.shape
    Cout = w1.shape[-1]
    return pl.pallas_call(
        _conv1_bn_kernel,
        out_shape=(jax.ShapeDtypeStruct((N, Ho, Wo, Cout), jnp.float32),
                   jax.ShapeDtypeStruct((N, 1, Cout), jnp.float32),
                   jax.ShapeDtypeStruct((N, 1, Cout), jnp.float32)),
        grid=(N,),
        in_specs=[
            pl.BlockSpec((None, HP2, Wq, Cin), lambda n: (n, 0, 0, 0)),
            pl.BlockSpec((1, Cin), lambda n: (0, 0)),
            pl.BlockSpec((1, Cin), lambda n: (0, 0)),
            pl.BlockSpec((9, Cin, Cout), lambda n: (0, 0, 0)),
            pl.BlockSpec((1, Cout), lambda n: (0, 0)),
        ],
        out_specs=(
            pl.BlockSpec((None, Ho, Wo, Cout), lambda n: (n, 0, 0, 0)),
            pl.BlockSpec((None, 1, Cout), lambda n: (n, 0, 0)),
            pl.BlockSpec((None, 1, Cout), lambda n: (n, 0, 0)),
        ),
        compiler_params=_compiler_params(),
    )(xpp, scale1, shift1, w1, b1)


def conv2_skip_fused(gp, scale2, shift2, w2, xs, wout, b):
    N, Hp, Wp, Cout = gp.shape
    Ho, Wo = Hp - 2, Wp - 2
    Cin = xs.shape[-1]
    return pl.pallas_call(
        _conv2_skip_kernel,
        out_shape=jax.ShapeDtypeStruct((N, Ho, Wo, Cout), jnp.float32),
        grid=(N,),
        in_specs=[
            pl.BlockSpec((None, Hp, Wp, Cout), lambda n: (n, 0, 0, 0)),
            pl.BlockSpec((1, Cout), lambda n: (0, 0)),
            pl.BlockSpec((1, Cout), lambda n: (0, 0)),
            pl.BlockSpec((9, Cout, Cout), lambda n: (0, 0, 0)),
            pl.BlockSpec((None, Ho, Wo, Cin), lambda n: (n, 0, 0, 0)),
            pl.BlockSpec((Cin, Cout), lambda n: (0, 0)),
            pl.BlockSpec((1, Cout), lambda n: (0, 0)),
        ],
        out_specs=pl.BlockSpec((None, Ho, Wo, Cout), lambda n: (n, 0, 0, 0)),
        compiler_params=_compiler_params(),
    )(gp, scale2, shift2, w2, xs, wout, b)


# ------------------------------ JAX glue ----------------------------------- #

def _pad_hw(x_nhwc, pad_val):
    """Pad H and W by 1 with a per-channel constant (XLA layout glue)."""
    N, H, W, C = x_nhwc.shape
    out = jnp.broadcast_to(pad_val.reshape(1, 1, 1, C), (N, H + 2, W + 2, C))
    return out.at[:, 1:H + 1, 1:W + 1, :].set(x_nhwc)


def _folded_bn(s, q, m, gamma, beta):
    mean = s / m
    var = jnp.maximum(q / m - mean * mean, 0.0)          # clamp cancellation
    scale = gamma.reshape(-1) * lax.rsqrt(var + BN_EPS)
    shift = beta.reshape(-1) - mean * scale
    safe = jnp.where(scale == 0.0, 1.0, scale)
    pad = jnp.where(scale == 0.0, 0.0, -shift / safe)    # relu(pad*scale+shift)=0
    return scale, shift, pad


def res_block_forward(x_nchw, params, *, max_stats_rows=8192):
    x = jnp.transpose(x_nchw, (0, 2, 3, 1)).astype(jnp.float32)   # NCHW -> NHWC
    N, H, W, Cin = x.shape
    assert H % 2 == 0 and W % 2 == 0, "even spatial dims expected"
    Cout = params["w1"].shape[-1]
    Ho, Wo = H // 2, W // 2
    M1 = N * H * W

    # batch1 statistics (Pallas lane-packed reduction) -> folded scale/shift/pad
    s1, q1 = bn_channel_stats(x.reshape(M1, Cin), max_stats_rows)
    scale1, shift1, pad1 = _folded_bn(s1, q1, M1,
                                      params["bn1_gamma"], params["bn1_beta"])

    # conv1 input: per-channel pad + stride-2 W-polyphase reorder (wrapper glue)
    xpad = _pad_hw(x, pad1)                                       # (N, H+2, W+2, Cin)
    Wq = (W + 2) // 2
    xpp = xpad.reshape(N, H + 2, Wq, 2, Cin)
    xpp = jnp.transpose(xpp, (0, 1, 3, 2, 4)).reshape(N, (H + 2) * 2, Wq, Cin)

    # conv1 (3x3 s2 p1) + fused BN1-apply+ReLU + fused BN2 partial stats
    f1, ps, pq = conv1_bn_fused(
        xpp, scale1.reshape(1, Cin), shift1.reshape(1, Cin),
        params["w1"].reshape(9 * Cin, Cout).reshape(9, Cin, Cout),
        params["b1"].reshape(1, Cout), Ho, Wo)

    M2 = N * Ho * Wo
    scale2, shift2, pad2 = _folded_bn(ps.sum(axis=(0, 1)), pq.sum(axis=(0, 1)),
                                      M2, params["bn2_gamma"], params["bn2_beta"])

    # conv2 (3x3 s1 p1) + fused BN2-apply+ReLU + 1x1-stride-2 skip, one kernel
    gp = _pad_hw(f1, pad2)                                        # (N, Ho+2, Wo+2, Cout)
    xs = x[:, ::2, ::2, :]                                        # (N, Ho, Wo, Cin)
    b = (params["b2"] + params["b_out"]).reshape(1, Cout)
    out = conv2_skip_fused(
        gp, scale2.reshape(1, Cout), shift2.reshape(1, Cout),
        params["w2"].reshape(9 * Cout, Cout).reshape(9, Cout, Cout),
        xs, params["w_out"], b)
    return jnp.transpose(out, (0, 3, 1, 2))                       # NHWC -> NCHW


# ------------------------- deterministic parameters ------------------------ #

def init_params(key, Cin, Cout):
    ks = jax.random.split(key, 10)
    f32 = jnp.float32
    return {
        "bn1_gamma": (1.0 + 0.1 * jax.random.normal(ks[0], (1, Cin))).astype(f32),
        "bn1_beta":  (0.1 * jax.random.normal(ks[1], (1, Cin))).astype(f32),
        "w1":        (0.1 * jax.random.normal(ks[2], (3, 3, Cin, Cout))).astype(f32),
        "b1":        (0.1 * jax.random.normal(ks[3], (1, Cout))).astype(f32),
        "bn2_gamma": (1.0 + 0.1 * jax.random.normal(ks[4], (1, Cout))).astype(f32),
        "bn2_beta":  (0.1 * jax.random.normal(ks[5], (1, Cout))).astype(f32),
        "w2":        (0.1 * jax.random.normal(ks[6], (3, 3, Cout, Cout))).astype(f32),
        "b2":        (0.1 * jax.random.normal(ks[7], (1, Cout))).astype(f32),
        "w_out":     (0.1 * jax.random.normal(ks[8], (Cin, Cout))).astype(f32),
        "b_out":     (0.1 * jax.random.normal(ks[9], (1, Cout))).astype(f32),
    }


# ---------------------------- pure-JAX reference ---------------------------- #

def _im2col_ref(x_nhwc, k, stride, pad):
    """Reference-only patch extraction."""
    N, H, W, C = x_nhwc.shape
    xp = jnp.pad(x_nhwc, ((0, 0), (pad, pad), (pad, pad), (0, 0)))
    Ho = (H + 2 * pad - k) // stride + 1
    Wo = (W + 2 * pad - k) // stride + 1
    cols = []
    for kh in range(k):
        for kw in range(k):
            cols.append(
                xp[:, kh:kh + stride * (Ho - 1) + 1:stride,
                      kw:kw + stride * (Wo - 1) + 1:stride, :]
            )
    cols = jnp.stack(cols, axis=3)
    return cols.reshape(N * Ho * Wo, k * k * C), Ho, Wo


def reference_forward(x_nchw, p):
    x = jnp.transpose(x_nchw, (0, 2, 3, 1)).astype(jnp.float32)
    N, H, W, Cin = x.shape
    Cout = p["w1"].shape[-1]

    def bn_relu_ref(x2d, g, b):
        mean = jnp.mean(x2d, axis=0, keepdims=True)
        var = jnp.mean((x2d - mean) ** 2, axis=0, keepdims=True)
        return jnp.maximum((x2d - mean) * lax.rsqrt(var + BN_EPS) * g + b, 0.0)

    f = bn_relu_ref(x.reshape(N * H * W, Cin), p["bn1_gamma"], p["bn1_beta"])
    p1, Ho, Wo = _im2col_ref(f.reshape(N, H, W, Cin), 3, 2, 1)
    f = jnp.dot(p1, p["w1"].reshape(9 * Cin, Cout), precision="highest") + p["b1"]
    f = bn_relu_ref(f, p["bn2_gamma"], p["bn2_beta"])
    p2, _, _ = _im2col_ref(f.reshape(N, Ho, Wo, Cout), 3, 1, 1)
    f = jnp.dot(p2, p["w2"].reshape(9 * Cout, Cout), precision="highest") + p["b2"]
    xs = x[:, ::2, ::2, :].reshape(N * Ho * Wo, Cin)
    s = jnp.dot(xs, p["w_out"], precision="highest") + p["b_out"]
    out = (s + f).reshape(N, Ho, Wo, Cout)
    return jnp.transpose(out, (0, 3, 1, 2))


# ----------------------------------- main ----------------------------------- #

if __name__ == "__main__":
    key = jax.random.PRNGKey(0)
    kx, kp = jax.random.split(key)
    N, Cin, Cout, H, W = 2, 4, 8, 16, 16

    x = jax.random.normal(kx, (N, Cin, H, W), dtype=jnp.float32)   # NCHW input
    params = init_params(kp, Cin, Cout)
    ref = reference_forward(x, params)

    fwd = jax.jit(res_block_forward, static_argnames=("max_stats_rows",))

    # Default (large) stats tiles: single-tile reduction at this toy size.
    out = jax.block_until_ready(fwd(x, params))
    assert out.shape == (N, Cout, H // 2, W // 2), out.shape
    err = float(jnp.max(jnp.abs(out - ref)))
    if err > 1e-3:
        raise AssertionError(f"Pallas output mismatch (default tiles): {err}")

    # Small stats tiles: exercises the multi-tile parallel partial-sum fold.
    out_small = jax.block_until_ready(fwd(x, params, max_stats_rows=8))
    err_small = float(jnp.max(jnp.abs(out_small - ref)))
    if err_small > 1e-3:
        raise AssertionError(f"Pallas output mismatch (multi-tile stats): {err_small}")

    print("KERNEL_OK")
</pallas_src>

<mosaic_0001>
module attributes {stable_mosaic.version = 11 : i64} {
  func.func @_bn_stats_kernel(%arg0: i32, %arg1: memref<16x128xf32, #tpu.memory_space<vmem>>, %arg2: memref<1x1x128xf32, #tpu.memory_space<vmem>>, %arg3: memref<1x1x128xf32, #tpu.memory_space<vmem>>) attributes {dimension_semantics = [#tpu.dimension_semantics<parallel>], iteration_bounds = array<i64: 1>, scalar_prefetch = 0 : i64, scratch_operands = 0 : i64, tpu.core_type = #tpu.core_type<tc>, window_params = [{transform_indices = @transform_0, window_bounds = array<i64: 16, 128>}, {transform_indices = @transform_1, window_bounds = array<i64: 1, 1, 128>}, {transform_indices = @transform_2, window_bounds = array<i64: 1, 1, 128>}]} {
    %c0 = arith.constant 0 : index
    %c0_0 = arith.constant 0 : index
    %0 = vector.load %arg1[%c0, %c0_0] : memref<16x128xf32, #tpu.memory_space<vmem>>, vector<16x128xf32>
    %cst = arith.constant dense<0.000000e+00> : vector<128xf32>
    %1 = vector.multi_reduction <add>, %0, %cst [0] : vector<16x128xf32> to vector<128xf32>
    %2 = vector.shape_cast %1 : vector<128xf32> to vector<1x128xf32>
    %c0_1 = arith.constant 0 : index
    %c0_2 = arith.constant 0 : index
    %c0_3 = arith.constant 0 : index
    %3 = vector.load %arg2[%c0_1, %c0_2, %c0_3] : memref<1x1x128xf32, #tpu.memory_space<vmem>>, vector<1x1x128xf32>
    %4 = vector.shape_cast %3 : vector<1x1x128xf32> to vector<1x128xf32>
    %5 = vector.shape_cast %2 : vector<1x128xf32> to vector<1x1x128xf32>
    tpu.vector_store %arg2[%c0_1, %c0_2, %c0_3], %5 {strides = array<i32>} : memref<1x1x128xf32, #tpu.memory_space<vmem>>, vector<1x1x128xf32>,
    %6 = arith.mulf %0, %0 : vector<16x128xf32>
    %cst_4 = arith.constant dense<0.000000e+00> : vector<128xf32>
    %7 = vector.multi_reduction <add>, %6, %cst_4 [0] : vector<16x128xf32> to vector<128xf32>
    %8 = vector.shape_cast %7 : vector<128xf32> to vector<1x128xf32>
    %c0_5 = arith.constant 0 : index
    %c0_6 = arith.constant 0 : index
    %c0_7 = arith.constant 0 : index
    %9 = vector.load %arg3[%c0_5, %c0_6, %c0_7] : memref<1x1x128xf32, #tpu.memory_space<vmem>>, vector<1x1x128xf32>
    %10 = vector.shape_cast %9 : vector<1x1x128xf32> to vector<1x128xf32>
    %11 = vector.shape_cast %8 : vector<1x128xf32> to vector<1x1x128xf32>
    tpu.vector_store %arg3[%c0_5, %c0_6, %c0_7], %11 {strides = array<i32>} : memref<1x1x128xf32, #tpu.memory_space<vmem>>, vector<1x1x128xf32>,
    return
  }
  func.func @transform_0(%arg0: i32) -> (i32, i32) {
    %c0_i32 = arith.constant 0 : i32
    %c0_i32_0 = arith.constant 0 : i32
    return %arg0, %c0_i32 : i32, i32
  }
  func.func @transform_1(%arg0: i32) -> (i32, i32, i32) {
    %c0_i32 = arith.constant 0 : i32
    %c0_i32_0 = arith.constant 0 : i32
    %c0_i32_1 = arith.constant 0 : i32
    return %arg0, %c0_i32, %c0_i32_0 : i32, i32, i32
  }
  func.func @transform_2(%arg0: i32) -> (i32, i32, i32) {
    %c0_i32 = arith.constant 0 : i32
    %c0_i32_0 = arith.constant 0 : i32
    %c0_i32_1 = arith.constant 0 : i32
    return %arg0, %c0_i32, %c0_i32_0 : i32, i32, i32
  }
}

module attributes {stable_mosaic.version = 11 : i64} {
  func.func @_conv1_bn_kernel(%arg0: i32, %arg1: memref<1x36x9x4xf32, #tpu.memory_space<vmem>>, %arg2: memref<1x4xf32, #tpu.memory_space<vmem>>, %arg3: memref<1x4xf32, #tpu.memory_space<vmem>>, %arg4: memref<9x4x8xf32, #tpu.memory_space<vmem>>, %arg5: memref<1x8xf32, #tpu.memory_space<vmem>>, %arg6: memref<1x8x8x8xf32, #tpu.memory_space<vmem>>, %arg7: memref<1x1x8xf32, #tpu.memory_space<vmem>>, %arg8: memref<1x1x8xf32, #tpu.memory_space<vmem>>) attributes {dimension_semantics = [#tpu.dimension_semantics<parallel>], iteration_bounds = array<i64: 2>, scalar_prefetch = 0 : i64, scratch_operands = 0 : i64, tpu.core_type = #tpu.core_type<tc>, window_params = [{transform_indices = @transform_0, window_bounds = array<i64: 1, 36, 9, 4>}, {pipeline_mode = #tpu.pipeline_mode<synchronous>, transform_indices = @transform_1, window_bounds = array<i64: 1, 4>}, {pipeline_mode = #tpu.pipeline_mode<synchronous>, transform_indices = @transform_2, window_bounds = array<i64: 1, 4>}, {pipeline_mode = #tpu.pipeline_mode<synchronous>, transform_indices = @transform_3, window_bounds = array<i64: 9, 4, 8>}, {pipeline_mode = #tpu.pipeline_mode<synchronous>, transform_indices = @transform_4, window_bounds = array<i64: 1, 8>}, {transform_indices = @transform_5, window_bounds = array<i64: 1, 8, 8, 8>}, {transform_indices = @transform_6, window_bounds = array<i64: 1, 1, 8>}, {transform_indices = @transform_7, window_bounds = array<i64: 1, 1, 8>}]} {
    %c0 = arith.constant 0 : index
    %c0_0 = arith.constant 0 : index
    %0 = vector.load %arg2[%c0, %c0_0] : memref<1x4xf32, #tpu.memory_space<vmem>>, vector<1x4xf32>
    %c0_1 = arith.constant 0 : index
    %c0_2 = arith.constant 0 : index
    %1 = vector.load %arg3[%c0_1, %c0_2] : memref<1x4xf32, #tpu.memory_space<vmem>>, vector<1x4xf32>
    %c0_3 = arith.constant 0 : index
    %c0_4 = arith.constant 0 : index
    %2 = vector.load %arg5[%c0_3, %c0_4] : memref<1x8xf32, #tpu.memory_space<vmem>>, vector<1x8xf32>
    %c0_5 = arith.constant 0 : index
    %c0_6 = arith.constant 0 : index
    %c0_7 = arith.constant 0 : index
    %3 = vector.load %arg4[%c0_5, %c0_6, %c0_7] : memref<9x4x8xf32, #tpu.memory_space<vmem>>, vector<9x4x8xf32>
    %cst = arith.constant 0.000000e+00 : f32
    %4 = vector.broadcast %cst : f32 to vector<1x8xf32>
    %c0_8 = arith.constant 0 : index
    %c0_9 = arith.constant 0 : index
    %c0_10 = arith.constant 0 : index
    %5 = vector.load %arg7[%c0_8, %c0_9, %c0_10] : memref<1x1x8xf32, #tpu.memory_space<vmem>>, vector<1x1x8xf32>
    %6 = vector.shape_cast %5 : vector<1x1x8xf32> to vector<1x8xf32>
    %7 = vector.shape_cast %4 : vector<1x8xf32> to vector<1x1x8xf32>
    tpu.vector_store %arg7[%c0_8, %c0_9, %c0_10], %7 {strides = array<i32>} : memref<1x1x8xf32, #tpu.memory_space<vmem>>, vector<1x1x8xf32>,
    %cst_11 = arith.constant 0.000000e+00 : f32
    %8 = vector.broadcast %cst_11 : f32 to vector<1x8xf32>
    %c0_12 = arith.constant 0 : index
    %c0_13 = arith.constant 0 : index
    %c0_14 = arith.constant 0 : index
    %9 = vector.load %arg8[%c0_12, %c0_13, %c0_14] : memref<1x1x8xf32, #tpu.memory_space<vmem>>, vector<1x1x8xf32>
    %10 = vector.shape_cast %9 : vector<1x1x8xf32> to vector<1x8xf32>
    %11 = vector.shape_cast %8 : vector<1x8xf32> to vector<1x1x8xf32>
    tpu.vector_store %arg8[%c0_12, %c0_13, %c0_14], %11 {strides = array<i32>} : memref<1x1x8xf32, #tpu.memory_space<vmem>>, vector<1x1x8xf32>,
    %c0_i32 = arith.constant 0 : i32
    %c8_i32 = arith.constant 8 : i32
    %12 = arith.addi %c0_i32, %c8_i32 : i32
    %c1_i32 = arith.constant 1 : i32
    scf.for %arg9 = %c0_i32 to %12 step %c1_i32  : i32 {
      %c1_i32_16 = arith.constant 1 : i32
      %13 = arith.muli %arg9, %c1_i32_16 : i32
      %c0_i32_17 = arith.constant 0 : i32
      %14 = arith.addi %c0_i32_17, %13 : i32
      %cst_18 = arith.constant 0.000000e+00 : f32
      %15 = vector.broadcast %cst_18 : f32 to vector<8x8xf32>
      %c2_i32 = arith.constant 2 : i32
      %16 = arith.muli %c2_i32, %14 : i32
      %c0_i32_19 = arith.constant 0 : i32
      %17 = arith.addi %16, %c0_i32_19 : i32
      %c2_i32_20 = arith.constant 2 : i32
      %18 = arith.muli %17, %c2_i32_20 : i32
      %c0_i32_21 = arith.constant 0 : i32
      %19 = arith.addi %18, %c0_i32_21 : i32
      %c0_22 = arith.constant 0 : index
      %20 = arith.index_cast %19 : i32 to index
      %c0_23 = arith.constant 0 : index
      %c0_24 = arith.constant 0 : index
      %21 = vector.load %arg1[%c0_22, %20, %c0_23, %c0_24] : memref<1x36x9x4xf32, #tpu.memory_space<vmem>>, vector<1x1x8x4xf32>
      %22 = vector.shape_cast %21 : vector<1x1x8x4xf32> to vector<8x4xf32>
      %23 = vector.broadcast %0 : vector<1x4xf32> to vector<8x4xf32>
      %24 = arith.mulf %22, %23 : vector<8x4xf32>
      %25 = vector.broadcast %1 : vector<1x4xf32> to vector<8x4xf32>
      %26 = arith.addf %24, %25 : vector<8x4xf32>
      %cst_25 = arith.constant 0.000000e+00 : f32
      %27 = vector.broadcast %cst_25 : f32 to vector<8x4xf32>
      %28 = arith.maximumf %26, %27 : vector<8x4xf32>
      %29 = vector.extract_strided_slice %3 {offsets = [0, 0, 0], sizes = [1, 4, 8], strides = [1, 1, 1]} : vector<9x4x8xf32> to vector<1x4x8xf32>
      %30 = vector.shape_cast %29 : vector<1x4x8xf32> to vector<4x8xf32>
      %cst_26 = arith.constant dense<0.000000e+00> : vector<8x8xf32>
      %31 = tpu.matmul %28, %30, %cst_26 {dimension_numbers = #tpu.dot_dimension_numbers<[1], [0], [0], [1], [0, 0, 1, 1], [], []>} : vector<8x4xf32>, vector<4x8xf32>, vector<8x8xf32> -> vector<8x8xf32>
      %32 = arith.addf %15, %31 : vector<8x8xf32>
      %c2_i32_27 = arith.constant 2 : i32
      %33 = arith.muli %c2_i32_27, %14 : i32
      %c0_i32_28 = arith.constant 0 : i32
      %34 = arith.addi %33, %c0_i32_28 : i32
      %c2_i32_29 = arith.constant 2 : i32
      %35 = arith.muli %34, %c2_i32_29 : i32
      %c1_i32_30 = arith.constant 1 : i32
      %36 = arith.addi %35, %c1_i32_30 : i32
      %c0_31 = arith.constant 0 : index
      %37 = arith.index_cast %36 : i32 to index
      %c0_32 = arith.constant 0 : index
      %c0_33 = arith.constant 0 : index
      %38 = vector.load %arg1[%c0_31, %37, %c0_32, %c0_33] : memref<1x36x9x4xf32, #tpu.memory_space<vmem>>, vector<1x1x8x4xf32>
      %39 = vector.shape_cast %38 : vector<1x1x8x4xf32> to vector<8x4xf32>
      %40 = vector.broadcast %0 : vector<1x4xf32> to vector<8x4xf32>
      %41 = arith.mulf %39, %40 : vector<8x4xf32>
      %42 = vector.broadcast %1 : vector<1x4xf32> to vector<8x4xf32>
      %43 = arith.addf %41, %42 : vector<8x4xf32>
      %cst_34 = arith.constant 0.000000e+00 : f32
      %44 = vector.broadcast %cst_34 : f32 to vector<8x4xf32>
      %45 = arith.maximumf %43, %44 : vector<8x4xf32>
      %46 = vector.extract_strided_slice %3 {offsets = [1, 0, 0], sizes = [1, 4, 8], strides = [1, 1, 1]} : vector<9x4x8xf32> to vector<1x4x8xf32>
      %47 = vector.shape_cast %46 : vector<1x4x8xf32> to vector<4x8xf32>
      %cst_35 = arith.constant dense<0.000000e+00> : vector<8x8xf32>
      %48 = tpu.matmul %45, %47, %cst_35 {dimension_numbers = #tpu.dot_dimension_numbers<[1], [0], [0], [1], [0, 0, 1, 1], [], []>} : vector<8x4xf32>, vector<4x8xf32>, vector<8x8xf32> -> vector<8x8xf32>
      %49 = arith.addf %32, %48 : vector<8x8xf32>
      %c2_i32_36 = arith.constant 2 : i32
      %50 = arith.muli %c2_i32_36, %14 : i32
      %c0_i32_37 = arith.constant 0 : i32
      %51 = arith.addi %50, %c0_i32_37 : i32
      %c2_i32_38 = arith.constant 2 : i32
      %52 = arith.muli %51, %c2_i32_38 : i32
      %c0_i32_39 = arith.constant 0 : i32
      %53 = arith.addi %52, %c0_i32_39 : i32
      %c0_40 = arith.constant 0 : index
      %54 = arith.index_cast %53 : i32 to index
      %c1 = arith.constant 1 : index
      %c0_41 = arith.constant 0 : index
      %55 = vector.load %arg1[%c0_40, %54, %c1, %c0_41] : memref<1x36x9x4xf32, #tpu.memory_space<vmem>>, vector<1x1x8x4xf32>
      %56 = vector.shape_cast %55 : vector<1x1x8x4xf32> to vector<8x4xf32>
      %57 = vector.broadcast %0 : vector<1x4xf32> to vector<8x4xf32>
      %58 = arith.mulf %56, %57 : vector<8x4xf32>
      %59 = vector.broadcast %1 : vector<1x4xf32> to vector<8x4xf32>
      %60 = arith.addf %58, %59 : vector<8x4xf32>
      %cst_42 = arith.constant 0.000000e+00 : f32
      %61 = vector.broadcast %cst_42 : f32 to vector<8x4xf32>
      %62 = arith.maximumf %60, %61 : vector<8x4xf32>
      %63 = vector.extract_strided_slice %3 {offsets = [2, 0, 0], sizes = [1, 4, 8], strides = [1, 1, 1]} : vector<9x4x8xf32> to vector<1x4x8xf32>
      %64 = vector.shape_cast %63 : vector<1x4x8xf32> to vector<4x8xf32>
      %cst_43 = arith.constant dense<0.000000e+00> : vector<8x8xf32>
      %65 = tpu.matmul %62, %64, %cst_43 {dimension_numbers = #tpu.dot_dimension_numbers<[1], [0], [0], [1], [0, 0, 1, 1], [], []>} : vector<8x4xf32>, vector<4x8xf32>, vector<8x8xf32> -> vector<8x8xf32>
      %66 = arith.addf %49, %65 : vector<8x8xf32>
      %c2_i32_44 = arith.constant 2 : i32
      %67 = arith.muli %c2_i32_44, %14 : i32
      %c1_i32_45 = arith.constant 1 : i32
      %68 = arith.addi %67, %c1_i32_45 : i32
      %c2_i32_46 = arith.constant 2 : i32
      %69 = arith.muli %68, %c2_i32_46 : i32
      %c0_i32_47 = arith.constant 0 : i32
      %70 = arith.addi %69, %c0_i32_47 : i32
      %c0_48 = arith.constant 0 : index
      %71 = arith.index_cast %70 : i32 to index
      %c0_49 = arith.constant 0 : index
      %c0_50 = arith.constant 0 : index
      %72 = vector.load %arg1[%c0_48, %71, %c0_49, %c0_50] : memref<1x36x9x4xf32, #tpu.memory_space<vmem>>, vector<1x1x8x4xf32>
      %73 = vector.shape_cast %72 : vector<1x1x8x4xf32> to vector<8x4xf32>
      %74 = vector.broadcast %0 : vector<1x4xf32> to vector<8x4xf32>
      %75 = arith.mulf %73, %74 : vector<8x4xf32>
      %76 = vector.broadcast %1 : vector<1x4xf32> to vector<8x4xf32>
      %77 = arith.addf %75, %76 : vector<8x4xf32>
      %cst_51 = arith.constant 0.000000e+00 : f32
      %78 = vector.broadcast %cst_51 : f32 to vector<8x4xf32>
      %79 = arith.maximumf %77, %78 : vector<8x4xf32>
      %80 = vector.extract_strided_slice %3 {offsets = [3, 0, 0], sizes = [1, 4, 8], strides = [1, 1, 1]} : vector<9x4x8xf32> to vector<1x4x8xf32>
      %81 = vector.shape_cast %80 : vector<1x4x8xf32> to vector<4x8xf32>
      %cst_52 = arith.constant dense<0.000000e+00> : vector<8x8xf32>
      %82 = tpu.matmul %79, %81, %cst_52 {dimension_numbers = #tpu.dot_dimension_numbers<[1], [0], [0], [1], [0, 0, 1, 1], [], []>} : vector<8x4xf32>, vector<4x8xf32>, vector<8x8xf32> -> vector<8x8xf32>
      %83 = arith.addf %66, %82 : vector<8x8xf32>
      %c2_i32_53 = arith.constant 2 : i32
      %84 = arith.muli %c2_i32_53, %14 : i32
      %c1_i32_54 = arith.constant 1 : i32
      %85 = arith.addi %84, %c1_i32_54 : i32
      %c2_i32_55 = arith.constant 2 : i32
      %86 = arith.muli %85, %c2_i32_55 : i32
      %c1_i32_56 = arith.constant 1 : i32
      %87 = arith.addi %86, %c1_i32_56 : i32
      %c0_57 = arith.constant 0 : index
      %88 = arith.index_cast %87 : i32 to index
      %c0_58 = arith.constant 0 : index
      %c0_59 = arith.constant 0 : index
      %89 = vector.load %arg1[%c0_57, %88, %c0_58, %c0_59] : memref<1x36x9x4xf32, #tpu.memory_space<vmem>>, vector<1x1x8x4xf32>
      %90 = vector.shape_cast %89 : vector<1x1x8x4xf32> to vector<8x4xf32>
      %91 = vector.broadcast %0 : vector<1x4xf32> to vector<8x4xf32>
      %92 = arith.mulf %90, %91 : vector<8x4xf32>
      %93 = vector.broadcast %1 : vector<1x4xf32> to vector<8x4xf32>
      %94 = arith.addf %92, %93 : vector<8x4xf32>
      %cst_60 = arith.constant 0.000000e+00 : f32
      %95 = vector.broadcast %cst_60 : f32 to vector<8x4xf32>
      %96 = arith.maximumf %94, %95 : vector<8x4xf32>
      %97 = vector.extract_strided_slice %3 {offsets = [4, 0, 0], sizes = [1, 4, 8], strides = [1, 1, 1]} : vector<9x4x8xf32> to vector<1x4x8xf32>
      %98 = vector.shape_cast %97 : vector<1x4x8xf32> to vector<4x8xf32>
      %cst_61 = arith.constant dense<0.000000e+00> : vector<8x8xf32>
      %99 = tpu.matmul %96, %98, %cst_61 {dimension_numbers = #tpu.dot_dimension_numbers<[1], [0], [0], [1], [0, 0, 1, 1], [], []>} : vector<8x4xf32>, vector<4x8xf32>, vector<8x8xf32> -> vector<8x8xf32>
      %100 = arith.addf %83, %99 : vector<8x8xf32>
      %c2_i32_62 = arith.constant 2 : i32
      %101 = arith.muli %c2_i32_62, %14 : i32
      %c1_i32_63 = arith.constant 1 : i32
      %102 = arith.addi %101, %c1_i32_63 : i32
      %c2_i32_64 = arith.constant 2 : i32
      %103 = arith.muli %102, %c2_i32_64 : i32
      %c0_i32_65 = arith.constant 0 : i32
      %104 = arith.addi %103, %c0_i32_65 : i32
      %c0_66 = arith.constant 0 : index
      %105 = arith.index_cast %104 : i32 to index
      %c1_67 = arith.constant 1 : index
      %c0_68 = arith.constant 0 : index
      %106 = vector.load %arg1[%c0_66, %105, %c1_67, %c0_68] : memref<1x36x9x4xf32, #tpu.memory_space<vmem>>, vector<1x1x8x4xf32>
      %107 = vector.shape_cast %106 : vector<1x1x8x4xf32> to vector<8x4xf32>
      %108 = vector.broadcast %0 : vector<1x4xf32> to vector<8x4xf32>
      %109 = arith.mulf %107, %108 : vector<8x4xf32>
      %110 = vector.broadcast %1 : vector<1x4xf32> to vector<8x4xf32>
      %111 = arith.addf %109, %110 : vector<8x4xf32>
      %cst_69 = arith.constant 0.000000e+00 : f32
      %112 = vector.broadcast %cst_69 : f32 to vector<8x4xf32>
      %113 = arith.maximumf %111, %112 : vector<8x4xf32>
      %114 = vector.extract_strided_slice %3 {offsets = [5, 0, 0], sizes = [1, 4, 8], strides = [1, 1, 1]} : vector<9x4x8xf32> to vector<1x4x8xf32>
      %115 = vector.shape_cast %114 : vector<1x4x8xf32> to vector<4x8xf32>
      %cst_70 = arith.constant dense<0.000000e+00> : vector<8x8xf32>
      %116 = tpu.matmul %113, %115, %cst_70 {dimension_numbers = #tpu.dot_dimension_numbers<[1], [0], [0], [1], [0, 0, 1, 1], [], []>} : vector<8x4xf32>, vector<4x8xf32>, vector<8x8xf32> -> vector<8x8xf32>
      %117 = arith.addf %100, %116 : vector<8x8xf32>
      %c2_i32_71 = arith.constant 2 : i32
      %118 = arith.muli %c2_i32_71, %14 : i32
      %c2_i32_72 = arith.constant 2 : i32
      %119 = arith.addi %118, %c2_i32_72 : i32
      %c2_i32_73 = arith.constant 2 : i32
      %120 = arith.muli %119, %c2_i32_73 : i32
      %c0_i32_74 = arith.constant 0 : i32
      %121 = arith.addi %120, %c0_i32_74 : i32
      %c0_75 = arith.constant 0 : index
      %122 = arith.index_cast %121 : i32 to index
      %c0_76 = arith.constant 0 : index
      %c0_77 = arith.constant 0 : index
      %123 = vector.load %arg1[%c0_75, %122, %c0_76, %c0_77] : memref<1x36x9x4xf32, #tpu.memory_space<vmem>>, vector<1x1x8x4xf32>
      %124 = vector.shape_cast %123 : vector<1x1x8x4xf32> to vector<8x4xf32>
      %125 = vector.broadcast %0 : vector<1x4xf32> to vector<8x4xf32>
      %126 = arith.mulf %124, %125 : vector<8x4xf32>
      %127 = vector.broadcast %1 : vector<1x4xf32> to vector<8x4xf32>
      %128 = arith.addf %126, %127 : vector<8x4xf32>
      %cst_78 = arith.constant 0.000000e+00 : f32
      %129 = vector.broadcast %cst_78 : f32 to vector<8x4xf32>
      %130 = arith.maximumf %128, %129 : vector<8x4xf32>
      %131 = vector.extract_strided_slice %3 {offsets = [6, 0, 0], sizes = [1, 4, 8], strides = [1, 1, 1]} : vector<9x4x8xf32> to vector<1x4x8xf32>
      %132 = vector.shape_cast %131 : vector<1x4x8xf32> to vector<4x8xf32>
      %cst_79 = arith.constant dense<0.000000e+00> : vector<8x8xf32>
      %133 = tpu.matmul %130, %132, %cst_79 {dimension_numbers = #tpu.dot_dimension_numbers<[1], [0], [0], [1], [0, 0, 1, 1], [], []>} : vector<8x4xf32>, vector<4x8xf32>, vector<8x8xf32> -> vector<8x8xf32>
      %134 = arith.addf %117, %133 : vector<8x8xf32>
      %c2_i32_80 = arith.constant 2 : i32
      %135 = arith.muli %c2_i32_80, %14 : i32
      %c2_i32_81 = arith.constant 2 : i32
      %136 = arith.addi %135, %c2_i32_81 : i32
      %c2_i32_82 = arith.constant 2 : i32
      %137 = arith.muli %136, %c2_i32_82 : i32
      %c1_i32_83 = arith.constant 1 : i32
      %138 = arith.addi %137, %c1_i32_83 : i32
      %c0_84 = arith.constant 0 : index
      %139 = arith.index_cast %138 : i32 to index
      %c0_85 = arith.constant 0 : index
      %c0_86 = arith.constant 0 : index
      %140 = vector.load %arg1[%c0_84, %139, %c0_85, %c0_86] : memref<1x36x9x4xf32, #tpu.memory_space<vmem>>, vector<1x1x8x4xf32>
      %141 = vector.shape_cast %140 : vector<1x1x8x4xf32> to vector<8x4xf32>
      %142 = vector.broadcast %0 : vector<1x4xf32> to vector<8x4xf32>
      %143 = arith.mulf %141, %142 : vector<8x4xf32>
      %144 = vector.broadcast %1 : vector<1x4xf32> to vector<8x4xf32>
      %145 = arith.addf %143, %144 : vector<8x4xf32>
      %cst_87 = arith.constant 0.000000e+00 : f32
      %146 = vector.broadcast %cst_87 : f32 to vector<8x4xf32>
      %147 = arith.maximumf %145, %146 : vector<8x4xf32>
      %148 = vector.extract_strided_slice %3 {offsets = [7, 0, 0], sizes = [1, 4, 8], strides = [1, 1, 1]} : vector<9x4x8xf32> to vector<1x4x8xf32>
      %149 = vector.shape_cast %148 : vector<1x4x8xf32> to vector<4x8xf32>
      %cst_88 = arith.constant dense<0.000000e+00> : vector<8x8xf32>
      %150 = tpu.matmul %147, %149, %cst_88 {dimension_numbers = #tpu.dot_dimension_numbers<[1], [0], [0], [1], [0, 0, 1, 1], [], []>} : vector<8x4xf32>, vector<4x8xf32>, vector<8x8xf32> -> vector<8x8xf32>
      %151 = arith.addf %134, %150 : vector<8x8xf32>
      %c2_i32_89 = arith.constant 2 : i32
      %152 = arith.muli %c2_i32_89, %14 : i32
      %c2_i32_90 = arith.constant 2 : i32
      %153 = arith.addi %152, %c2_i32_90 : i32
      %c2_i32_91 = arith.constant 2 : i32
      %154 = arith.muli %153, %c2_i32_91 : i32
      %c0_i32_92 = arith.constant 0 : i32
      %155 = arith.addi %154, %c0_i32_92 : i32
      %c0_93 = arith.constant 0 : index
      %156 = arith.index_cast %155 : i32 to index
      %c1_94 = arith.constant 1 : index
      %c0_95 = arith.constant 0 : index
      %157 = vector.load %arg1[%c0_93, %156, %c1_94, %c0_95] : memref<1x36x9x4xf32, #tpu.memory_space<vmem>>, vector<1x1x8x4xf32>
      %158 = vector.shape_cast %157 : vector<1x1x8x4xf32> to vector<8x4xf32>
      %159 = vector.broadcast %0 : vector<1x4xf32> to vector<8x4xf32>
      %160 = arith.mulf %158, %159 : vector<8x4xf32>
      %161 = vector.broadcast %1 : vector<1x4xf32> to vector<8x4xf32>
      %162 = arith.addf %160, %161 : vector<8x4xf32>
      %cst_96 = arith.constant 0.000000e+00 : f32
      %163 = vector.broadcast %cst_96 : f32 to vector<8x4xf32>
      %164 = arith.maximumf %162, %163 : vector<8x4xf32>
      %165 = vector.extract_strided_slice %3 {offsets = [8, 0, 0], sizes = [1, 4, 8], strides = [1, 1, 1]} : vector<9x4x8xf32> to vector<1x4x8xf32>
      %166 = vector.shape_cast %165 : vector<1x4x8xf32> to vector<4x8xf32>
      %cst_97 = arith.constant dense<0.000000e+00> : vector<8x8xf32>
      %167 = tpu.matmul %164, %166, %cst_97 {dimension_numbers = #tpu.dot_dimension_numbers<[1], [0], [0], [1], [0, 0, 1, 1], [], []>} : vector<8x4xf32>, vector<4x8xf32>, vector<8x8xf32> -> vector<8x8xf32>
      %168 = arith.addf %151, %167 : vector<8x8xf32>
      %169 = vector.broadcast %2 : vector<1x8xf32> to vector<8x8xf32>
      %170 = arith.addf %168, %169 : vector<8x8xf32>
      %c0_98 = arith.constant 0 : index
      %171 = arith.index_cast %14 : i32 to index
      %c0_99 = arith.constant 0 : index
      %c0_100 = arith.constant 0 : index
      %172 = vector.load %arg6[%c0_98, %171, %c0_99, %c0_100] : memref<1x8x8x8xf32, #tpu.memory_space<vmem>>, vector<1x1x8x8xf32>
      %173 = vector.shape_cast %172 : vector<1x1x8x8xf32> to vector<8x8xf32>
      %174 = vector.shape_cast %170 : vector<8x8xf32> to vector<1x1x8x8xf32>
      tpu.vector_store %arg6[%c0_98, %171, %c0_99, %c0_100], %174 {strides = array<i32>} : memref<1x8x8x8xf32, #tpu.memory_space<vmem>>, vector<1x1x8x8xf32>,
      %c0_101 = arith.constant 0 : index
      %c0_102 = arith.constant 0 : index
      %c0_103 = arith.constant 0 : index
      %175 = vector.load %arg7[%c0_101, %c0_102, %c0_103] : memref<1x1x8xf32, #tpu.memory_space<vmem>>, vector<1x1x8xf32>
      %176 = vector.shape_cast %175 : vector<1x1x8xf32> to vector<1x8xf32>
      %cst_104 = arith.constant dense<0.000000e+00> : vector<8xf32>
      %177 = vector.multi_reduction <add>, %170, %cst_104 [0] : vector<8x8xf32> to vector<8xf32>
      %178 = vector.shape_cast %177 : vector<8xf32> to vector<1x8xf32>
      %179 = arith.addf %176, %178 : vector<1x8xf32>
      %c0_105 = arith.constant 0 : index
      %c0_106 = arith.constant 0 : index
      %c0_107 = arith.constant 0 : index
      %180 = vector.load %arg7[%c0_105, %c0_106, %c0_107] : memref<1x1x8xf32, #tpu.memory_space<vmem>>, vector<1x1x8xf32>
      %181 = vector.shape_cast %180 : vector<1x1x8xf32> to vector<1x8xf32>
      %182 = vector.shape_cast %179 : vector<1x8xf32> to vector<1x1x8xf32>
      tpu.vector_store %arg7[%c0_105, %c0_106, %c0_107], %182 {strides = array<i32>} : memref<1x1x8xf32, #tpu.memory_space<vmem>>, vector<1x1x8xf32>,
      %c0_108 = arith.constant 0 : index
      %c0_109 = arith.constant 0 : index
      %c0_110 = arith.constant 0 : index
      %183 = vector.load %arg8[%c0_108, %c0_109, %c0_110] : memref<1x1x8xf32, #tpu.memory_space<vmem>>, vector<1x1x8xf32>
      %184 = vector.shape_cast %183 : vector<1x1x8xf32> to vector<1x8xf32>
      %185 = arith.mulf %170, %170 : vector<8x8xf32>
      %cst_111 = arith.constant dense<0.000000e+00> : vector<8xf32>
      %186 = vector.multi_reduction <add>, %185, %cst_111 [0] : vector<8x8xf32> to vector<8xf32>
      %187 = vector.shape_cast %186 : vector<8xf32> to vector<1x8xf32>
      %188 = arith.addf %184, %187 : vector<1x8xf32>
      %c0_112 = arith.constant 0 : index
      %c0_113 = arith.constant 0 : index
      %c0_114 = arith.constant 0 : index
      %189 = vector.load %arg8[%c0_112, %c0_113, %c0_114] : memref<1x1x8xf32, #tpu.memory_space<vmem>>, vector<1x1x8xf32>
      %190 = vector.shape_cast %189 : vector<1x1x8xf32> to vector<1x8xf32>
      %191 = vector.shape_cast %188 : vector<1x8xf32> to vector<1x1x8xf32>
      tpu.vector_store %arg8[%c0_112, %c0_113, %c0_114], %191 {strides = array<i32>} : memref<1x1x8xf32, #tpu.memory_space<vmem>>, vector<1x1x8xf32>,
    }
    %c8_i32_15 = arith.constant 8 : i32
    return
  }
  func.func @transform_0(%arg0: i32) -> (i32, i32, i32, i32) {
    %c0_i32 = arith.constant 0 : i32
    %c0_i32_0 = arith.constant 0 : i32
    %c0_i32_1 = arith.constant 0 : i32
    %c0_i32_2 = arith.constant 0 : i32
    return %arg0, %c0_i32, %c0_i32_0, %c0_i32_1 : i32, i32, i32, i32
  }
  func.func @transform_1(%arg0: i32) -> (i32, i32) {
    %c0_i32 = arith.constant 0 : i32
    %c0_i32_0 = arith.constant 0 : i32
    %c0_i32_1 = arith.constant 0 : i32
    return %c0_i32, %c0_i32_0 : i32, i32
  }
  func.func @transform_2(%arg0: i32) -> (i32, i32) {
    %c0_i32 = arith.constant 0 : i32
    %c0_i32_0 = arith.constant 0 : i32
    %c0_i32_1 = arith.constant 0 : i32
    return %c0_i32, %c0_i32_0 : i32, i32
  }
  func.func @transform_3(%arg0: i32) -> (i32, i32, i32) {
    %c0_i32 = arith.constant 0 : i32
    %c0_i32_0 = arith.constant 0 : i32
    %c0_i32_1 = arith.constant 0 : i32
    %c0_i32_2 = arith.constant 0 : i32
    return %c0_i32, %c0_i32_0, %c0_i32_1 : i32, i32, i32
  }
  func.func @transform_4(%arg0: i32) -> (i32, i32) {
    %c0_i32 = arith.constant 0 : i32
    %c0_i32_0 = arith.constant 0 : i32
    %c0_i32_1 = arith.constant 0 : i32
    return %c0_i32, %c0_i32_0 : i32, i32
  }
  func.func @transform_5(%arg0: i32) -> (i32, i32, i32, i32) {
    %c0_i32 = arith.constant 0 : i32
    %c0_i32_0 = arith.constant 0 : i32
    %c0_i32_1 = arith.constant 0 : i32
    %c0_i32_2 = arith.constant 0 : i32
    return %arg0, %c0_i32, %c0_i32_0, %c0_i32_1 : i32, i32, i32, i32
  }
  func.func @transform_6(%arg0: i32) -> (i32, i32, i32) {
    %c0_i32 = arith.constant 0 : i32
    %c0_i32_0 = arith.constant 0 : i32
    %c0_i32_1 = arith.constant 0 : i32
    return %arg0, %c0_i32, %c0_i32_0 : i32, i32, i32
  }
  func.func @transform_7(%arg0: i32) -> (i32, i32, i32) {
    %c0_i32 = arith.constant 0 : i32
    %c0_i32_0 = arith.constant 0 : i32
    %c0_i32_1 = arith.constant 0 : i32
    return %arg0, %c0_i32, %c0_i32_0 : i32, i32, i32
  }
}

module attributes {stable_mosaic.version = 11 : i64} {
  func.func @_conv2_skip_kernel(%arg0: i32, %arg1: memref<1x10x10x8xf32, #tpu.memory_space<vmem>>, %arg2: memref<1x8xf32, #tpu.memory_space<vmem>>, %arg3: memref<1x8xf32, #tpu.memory_space<vmem>>, %arg4: memref<9x8x8xf32, #tpu.memory_space<vmem>>, %arg5: memref<1x8x8x4xf32, #tpu.memory_space<vmem>>, %arg6: memref<4x8xf32, #tpu.memory_space<vmem>>, %arg7: memref<1x8xf32, #tpu.memory_space<vmem>>, %arg8: memref<1x8x8x8xf32, #tpu.memory_space<vmem>>) attributes {dimension_semantics = [#tpu.dimension_semantics<parallel>], iteration_bounds = array<i64: 2>, scalar_prefetch = 0 : i64, scratch_operands = 0 : i64, tpu.core_type = #tpu.core_type<tc>, window_params = [{transform_indices = @transform_0, window_bounds = array<i64: 1, 10, 10, 8>}, {pipeline_mode = #tpu.pipeline_mode<synchronous>, transform_indices = @transform_1, window_bounds = array<i64: 1, 8>}, {pipeline_mode = #tpu.pipeline_mode<synchronous>, transform_indices = @transform_2, window_bounds = array<i64: 1, 8>}, {pipeline_mode = #tpu.pipeline_mode<synchronous>, transform_indices = @transform_3, window_bounds = array<i64: 9, 8, 8>}, {transform_indices = @transform_4, window_bounds = array<i64: 1, 8, 8, 4>}, {pipeline_mode = #tpu.pipeline_mode<synchronous>, transform_indices = @transform_5, window_bounds = array<i64: 4, 8>}, {pipeline_mode = #tpu.pipeline_mode<synchronous>, transform_indices = @transform_6, window_bounds = array<i64: 1, 8>}, {transform_indices = @transform_7, window_bounds = array<i64: 1, 8, 8, 8>}]} {
    %c0 = arith.constant 0 : index
    %c0_0 = arith.constant 0 : index
    %0 = vector.load %arg2[%c0, %c0_0] : memref<1x8xf32, #tpu.memory_space<vmem>>, vector<1x8xf32>
    %c0_1 = arith.constant 0 : index
    %c0_2 = arith.constant 0 : index
    %1 = vector.load %arg3[%c0_1, %c0_2] : memref<1x8xf32, #tpu.memory_space<vmem>>, vector<1x8xf32>
    %c0_3 = arith.constant 0 : index
    %c0_4 = arith.constant 0 : index
    %2 = vector.load %arg7[%c0_3, %c0_4] : memref<1x8xf32, #tpu.memory_space<vmem>>, vector<1x8xf32>
    %c0_5 = arith.constant 0 : index
    %c0_6 = arith.constant 0 : index
    %c0_7 = arith.constant 0 : index
    %3 = vector.load %arg4[%c0_5, %c0_6, %c0_7] : memref<9x8x8xf32, #tpu.memory_space<vmem>>, vector<9x8x8xf32>
    %c0_8 = arith.constant 0 : index
    %c0_9 = arith.constant 0 : index
    %4 = vector.load %arg6[%c0_8, %c0_9] : memref<4x8xf32, #tpu.memory_space<vmem>>, vector<4x8xf32>
    %c0_i32 = arith.constant 0 : i32
    %c8_i32 = arith.constant 8 : i32
    %5 = arith.addi %c0_i32, %c8_i32 : i32
    %c1_i32 = arith.constant 1 : i32
    scf.for %arg9 = %c0_i32 to %5 step %c1_i32  : i32 {
      %c1_i32_11 = arith.constant 1 : i32
      %6 = arith.muli %arg9, %c1_i32_11 : i32
      %c0_i32_12 = arith.constant 0 : i32
      %7 = arith.addi %c0_i32_12, %6 : i32
      %c0_13 = arith.constant 0 : index
      %8 = arith.index_cast %7 : i32 to index
      %c0_14 = arith.constant 0 : index
      %c0_15 = arith.constant 0 : index
      %9 = vector.load %arg5[%c0_13, %8, %c0_14, %c0_15] : memref<1x8x8x4xf32, #tpu.memory_space<vmem>>, vector<1x1x8x4xf32>
      %10 = vector.shape_cast %9 : vector<1x1x8x4xf32> to vector<8x4xf32>
      %cst = arith.constant dense<0.000000e+00> : vector<8x8xf32>
      %11 = tpu.matmul %10, %4, %cst {dimension_numbers = #tpu.dot_dimension_numbers<[1], [0], [0], [1], [0, 0, 1, 1], [], []>} : vector<8x4xf32>, vector<4x8xf32>, vector<8x8xf32> -> vector<8x8xf32>
      %c0_i32_16 = arith.constant 0 : i32
      %12 = arith.addi %7, %c0_i32_16 : i32
      %c0_17 = arith.constant 0 : index
      %13 = arith.index_cast %12 : i32 to index
      %c0_18 = arith.constant 0 : index
      %c0_19 = arith.constant 0 : index
      %14 = vector.load %arg1[%c0_17, %13, %c0_18, %c0_19] : memref<1x10x10x8xf32, #tpu.memory_space<vmem>>, vector<1x1x8x8xf32>
      %15 = vector.shape_cast %14 : vector<1x1x8x8xf32> to vector<8x8xf32>
      %16 = vector.broadcast %0 : vector<1x8xf32> to vector<8x8xf32>
      %17 = arith.mulf %15, %16 : vector<8x8xf32>
      %18 = vector.broadcast %1 : vector<1x8xf32> to vector<8x8xf32>
      %19 = arith.addf %17, %18 : vector<8x8xf32>
      %cst_20 = arith.constant 0.000000e+00 : f32
      %20 = vector.broadcast %cst_20 : f32 to vector<8x8xf32>
      %21 = arith.maximumf %19, %20 : vector<8x8xf32>
      %22 = vector.extract_strided_slice %3 {offsets = [0, 0, 0], sizes = [1, 8, 8], strides = [1, 1, 1]} : vector<9x8x8xf32> to vector<1x8x8xf32>
      %23 = vector.shape_cast %22 : vector<1x8x8xf32> to vector<8x8xf32>
      %cst_21 = arith.constant dense<0.000000e+00> : vector<8x8xf32>
      %24 = tpu.matmul %21, %23, %cst_21 {dimension_numbers = #tpu.dot_dimension_numbers<[1], [0], [0], [1], [0, 0, 1, 1], [], []>} : vector<8x8xf32>, vector<8x8xf32>, vector<8x8xf32> -> vector<8x8xf32>
      %25 = arith.addf %11, %24 : vector<8x8xf32>
      %c0_i32_22 = arith.constant 0 : i32
      %26 = arith.addi %7, %c0_i32_22 : i32
      %c0_23 = arith.constant 0 : index
      %27 = arith.index_cast %26 : i32 to index
      %c1 = arith.constant 1 : index
      %c0_24 = arith.constant 0 : index
      %28 = vector.load %arg1[%c0_23, %27, %c1, %c0_24] : memref<1x10x10x8xf32, #tpu.memory_space<vmem>>, vector<1x1x8x8xf32>
      %29 = vector.shape_cast %28 : vector<1x1x8x8xf32> to vector<8x8xf32>
      %30 = vector.broadcast %0 : vector<1x8xf32> to vector<8x8xf32>
      %31 = arith.mulf %29, %30 : vector<8x8xf32>
      %32 = vector.broadcast %1 : vector<1x8xf32> to vector<8x8xf32>
      %33 = arith.addf %31, %32 : vector<8x8xf32>
      %cst_25 = arith.constant 0.000000e+00 : f32
      %34 = vector.broadcast %cst_25 : f32 to vector<8x8xf32>
      %35 = arith.maximumf %33, %34 : vector<8x8xf32>
      %36 = vector.extract_strided_slice %3 {offsets = [1, 0, 0], sizes = [1, 8, 8], strides = [1, 1, 1]} : vector<9x8x8xf32> to vector<1x8x8xf32>
      %37 = vector.shape_cast %36 : vector<1x8x8xf32> to vector<8x8xf32>
      %cst_26 = arith.constant dense<0.000000e+00> : vector<8x8xf32>
      %38 = tpu.matmul %35, %37, %cst_26 {dimension_numbers = #tpu.dot_dimension_numbers<[1], [0], [0], [1], [0, 0, 1, 1], [], []>} : vector<8x8xf32>, vector<8x8xf32>, vector<8x8xf32> -> vector<8x8xf32>
      %39 = arith.addf %25, %38 : vector<8x8xf32>
      %c0_i32_27 = arith.constant 0 : i32
      %40 = arith.addi %7, %c0_i32_27 : i32
      %c0_28 = arith.constant 0 : index
      %41 = arith.index_cast %40 : i32 to index
      %c2 = arith.constant 2 : index
      %c0_29 = arith.constant 0 : index
      %42 = vector.load %arg1[%c0_28, %41, %c2, %c0_29] : memref<1x10x10x8xf32, #tpu.memory_space<vmem>>, vector<1x1x8x8xf32>
      %43 = vector.shape_cast %42 : vector<1x1x8x8xf32> to vector<8x8xf32>
      %44 = vector.broadcast %0 : vector<1x8xf32> to vector<8x8xf32>
      %45 = arith.mulf %43, %44 : vector<8x8xf32>
      %46 = vector.broadcast %1 : vector<1x8xf32> to vector<8x8xf32>
      %47 = arith.addf %45, %46 : vector<8x8xf32>
      %cst_30 = arith.constant 0.000000e+00 : f32
      %48 = vector.broadcast %cst_30 : f32 to vector<8x8xf32>
      %49 = arith.maximumf %47, %48 : vector<8x8xf32>
      %50 = vector.extract_strided_slice %3 {offsets = [2, 0, 0], sizes = [1, 8, 8], strides = [1, 1, 1]} : vector<9x8x8xf32> to vector<1x8x8xf32>
      %51 = vector.shape_cast %50 : vector<1x8x8xf32> to vector<8x8xf32>
      %cst_31 = arith.constant dense<0.000000e+00> : vector<8x8xf32>
      %52 = tpu.matmul %49, %51, %cst_31 {dimension_numbers = #tpu.dot_dimension_numbers<[1], [0], [0], [1], [0, 0, 1, 1], [], []>} : vector<8x8xf32>, vector<8x8xf32>, vector<8x8xf32> -> vector<8x8xf32>
      %53 = arith.addf %39, %52 : vector<8x8xf32>
      %c1_i32_32 = arith.constant 1 : i32
      %54 = arith.addi %7, %c1_i32_32 : i32
      %c0_33 = arith.constant 0 : index
      %55 = arith.index_cast %54 : i32 to index
      %c0_34 = arith.constant 0 : index
      %c0_35 = arith.constant 0 : index
      %56 = vector.load %arg1[%c0_33, %55, %c0_34, %c0_35] : memref<1x10x10x8xf32, #tpu.memory_space<vmem>>, vector<1x1x8x8xf32>
      %57 = vector.shape_cast %56 : vector<1x1x8x8xf32> to vector<8x8xf32>
      %58 = vector.broadcast %0 : vector<1x8xf32> to vector<8x8xf32>
      %59 = arith.mulf %57, %58 : vector<8x8xf32>
      %60 = vector.broadcast %1 : vector<1x8xf32> to vector<8x8xf32>
      %61 = arith.addf %59, %60 : vector<8x8xf32>
      %cst_36 = arith.constant 0.000000e+00 : f32
      %62 = vector.broadcast %cst_36 : f32 to vector<8x8xf32>
      %63 = arith.maximumf %61, %62 : vector<8x8xf32>
      %64 = vector.extract_strided_slice %3 {offsets = [3, 0, 0], sizes = [1, 8, 8], strides = [1, 1, 1]} : vector<9x8x8xf32> to vector<1x8x8xf32>
      %65 = vector.shape_cast %64 : vector<1x8x8xf32> to vector<8x8xf32>
      %cst_37 = arith.constant dense<0.000000e+00> : vector<8x8xf32>
      %66 = tpu.matmul %63, %65, %cst_37 {dimension_numbers = #tpu.dot_dimension_numbers<[1], [0], [0], [1], [0, 0, 1, 1], [], []>} : vector<8x8xf32>, vector<8x8xf32>, vector<8x8xf32> -> vector<8x8xf32>
      %67 = arith.addf %53, %66 : vector<8x8xf32>
      %c1_i32_38 = arith.constant 1 : i32
      %68 = arith.addi %7, %c1_i32_38 : i32
      %c0_39 = arith.constant 0 : index
      %69 = arith.index_cast %68 : i32 to index
      %c1_40 = arith.constant 1 : index
      %c0_41 = arith.constant 0 : index
      %70 = vector.load %arg1[%c0_39, %69, %c1_40, %c0_41] : memref<1x10x10x8xf32, #tpu.memory_space<vmem>>, vector<1x1x8x8xf32>
      %71 = vector.shape_cast %70 : vector<1x1x8x8xf32> to vector<8x8xf32>
      %72 = vector.broadcast %0 : vector<1x8xf32> to vector<8x8xf32>
      %73 = arith.mulf %71, %72 : vector<8x8xf32>
      %74 = vector.broadcast %1 : vector<1x8xf32> to vector<8x8xf32>
      %75 = arith.addf %73, %74 : vector<8x8xf32>
      %cst_42 = arith.constant 0.000000e+00 : f32
      %76 = vector.broadcast %cst_42 : f32 to vector<8x8xf32>
      %77 = arith.maximumf %75, %76 : vector<8x8xf32>
      %78 = vector.extract_strided_slice %3 {offsets = [4, 0, 0], sizes = [1, 8, 8], strides = [1, 1, 1]} : vector<9x8x8xf32> to vector<1x8x8xf32>
      %79 = vector.shape_cast %78 : vector<1x8x8xf32> to vector<8x8xf32>
      %cst_43 = arith.constant dense<0.000000e+00> : vector<8x8xf32>
      %80 = tpu.matmul %77, %79, %cst_43 {dimension_numbers = #tpu.dot_dimension_numbers<[1], [0], [0], [1], [0, 0, 1, 1], [], []>} : vector<8x8xf32>, vector<8x8xf32>, vector<8x8xf32> -> vector<8x8xf32>
      %81 = arith.addf %67, %80 : vector<8x8xf32>
      %c1_i32_44 = arith.constant 1 : i32
      %82 = arith.addi %7, %c1_i32_44 : i32
      %c0_45 = arith.constant 0 : index
      %83 = arith.index_cast %82 : i32 to index
      %c2_46 = arith.constant 2 : index
      %c0_47 = arith.constant 0 : index
      %84 = vector.load %arg1[%c0_45, %83, %c2_46, %c0_47] : memref<1x10x10x8xf32, #tpu.memory_space<vmem>>, vector<1x1x8x8xf32>
      %85 = vector.shape_cast %84 : vector<1x1x8x8xf32> to vector<8x8xf32>
      %86 = vector.broadcast %0 : vector<1x8xf32> to vector<8x8xf32>
      %87 = arith.mulf %85, %86 : vector<8x8xf32>
      %88 = vector.broadcast %1 : vector<1x8xf32> to vector<8x8xf32>
      %89 = arith.addf %87, %88 : vector<8x8xf32>
      %cst_48 = arith.constant 0.000000e+00 : f32
      %90 = vector.broadcast %cst_48 : f32 to vector<8x8xf32>
      %91 = arith.maximumf %89, %90 : vector<8x8xf32>
      %92 = vector.extract_strided_slice %3 {offsets = [5, 0, 0], sizes = [1, 8, 8], strides = [1, 1, 1]} : vector<9x8x8xf32> to vector<1x8x8xf32>
      %93 = vector.shape_cast %92 : vector<1x8x8xf32> to vector<8x8xf32>
      %cst_49 = arith.constant dense<0.000000e+00> : vector<8x8xf32>
      %94 = tpu.matmul %91, %93, %cst_49 {dimension_numbers = #tpu.dot_dimension_numbers<[1], [0], [0], [1], [0, 0, 1, 1], [], []>} : vector<8x8xf32>, vector<8x8xf32>, vector<8x8xf32> -> vector<8x8xf32>
      %95 = arith.addf %81, %94 : vector<8x8xf32>
      %c2_i32 = arith.constant 2 : i32
      %96 = arith.addi %7, %c2_i32 : i32
      %c0_50 = arith.constant 0 : index
      %97 = arith.index_cast %96 : i32 to index
      %c0_51 = arith.constant 0 : index
      %c0_52 = arith.constant 0 : index
      %98 = vector.load %arg1[%c0_50, %97, %c0_51, %c0_52] : memref<1x10x10x8xf32, #tpu.memory_space<vmem>>, vector<1x1x8x8xf32>
      %99 = vector.shape_cast %98 : vector<1x1x8x8xf32> to vector<8x8xf32>
      %100 = vector.broadcast %0 : vector<1x8xf32> to vector<8x8xf32>
      %101 = arith.mulf %99, %100 : vector<8x8xf32>
      %102 = vector.broadcast %1 : vector<1x8xf32> to vector<8x8xf32>
      %103 = arith.addf %101, %102 : vector<8x8xf32>
      %cst_53 = arith.constant 0.000000e+00 : f32
      %104 = vector.broadcast %cst_53 : f32 to vector<8x8xf32>
      %105 = arith.maximumf %103, %104 : vector<8x8xf32>
      %106 = vector.extract_strided_slice %3 {offsets = [6, 0, 0], sizes = [1, 8, 8], strides = [1, 1, 1]} : vector<9x8x8xf32> to vector<1x8x8xf32>
      %107 = vector.shape_cast %106 : vector<1x8x8xf32> to vector<8x8xf32>
      %cst_54 = arith.constant dense<0.000000e+00> : vector<8x8xf32>
      %108 = tpu.matmul %105, %107, %cst_54 {dimension_numbers = #tpu.dot_dimension_numbers<[1], [0], [0], [1], [0, 0, 1, 1], [], []>} : vector<8x8xf32>, vector<8x8xf32>, vector<8x8xf32> -> vector<8x8xf32>
      %109 = arith.addf %95, %108 : vector<8x8xf32>
      %c2_i32_55 = arith.constant 2 : i32
      %110 = arith.addi %7, %c2_i32_55 : i32
      %c0_56 = arith.constant 0 : index
      %111 = arith.index_cast %110 : i32 to index
      %c1_57 = arith.constant 1 : index
      %c0_58 = arith.constant 0 : index
      %112 = vector.load %arg1[%c0_56, %111, %c1_57, %c0_58] : memref<1x10x10x8xf32, #tpu.memory_space<vmem>>, vector<1x1x8x8xf32>
      %113 = vector.shape_cast %112 : vector<1x1x8x8xf32> to vector<8x8xf32>
      %114 = vector.broadcast %0 : vector<1x8xf32> to vector<8x8xf32>
      %115 = arith.mulf %113, %114 : vector<8x8xf32>
      %116 = vector.broadcast %1 : vector<1x8xf32> to vector<8x8xf32>
      %117 = arith.addf %115, %116 : vector<8x8xf32>
      %cst_59 = arith.constant 0.000000e+00 : f32
      %118 = vector.broadcast %cst_59 : f32 to vector<8x8xf32>
      %119 = arith.maximumf %117, %118 : vector<8x8xf32>
      %120 = vector.extract_strided_slice %3 {offsets = [7, 0, 0], sizes = [1, 8, 8], strides = [1, 1, 1]} : vector<9x8x8xf32> to vector<1x8x8xf32>
      %121 = vector.shape_cast %120 : vector<1x8x8xf32> to vector<8x8xf32>
      %cst_60 = arith.constant dense<0.000000e+00> : vector<8x8xf32>
      %122 = tpu.matmul %119, %121, %cst_60 {dimension_numbers = #tpu.dot_dimension_numbers<[1], [0], [0], [1], [0, 0, 1, 1], [], []>} : vector<8x8xf32>, vector<8x8xf32>, vector<8x8xf32> -> vector<8x8xf32>
      %123 = arith.addf %109, %122 : vector<8x8xf32>
      %c2_i32_61 = arith.constant 2 : i32
      %124 = arith.addi %7, %c2_i32_61 : i32
      %c0_62 = arith.constant 0 : index
      %125 = arith.index_cast %124 : i32 to index
      %c2_63 = arith.constant 2 : index
      %c0_64 = arith.constant 0 : index
      %126 = vector.load %arg1[%c0_62, %125, %c2_63, %c0_64] : memref<1x10x10x8xf32, #tpu.memory_space<vmem>>, vector<1x1x8x8xf32>
      %127 = vector.shape_cast %126 : vector<1x1x8x8xf32> to vector<8x8xf32>
      %128 = vector.broadcast %0 : vector<1x8xf32> to vector<8x8xf32>
      %129 = arith.mulf %127, %128 : vector<8x8xf32>
      %130 = vector.broadcast %1 : vector<1x8xf32> to vector<8x8xf32>
      %131 = arith.addf %129, %130 : vector<8x8xf32>
      %cst_65 = arith.constant 0.000000e+00 : f32
      %132 = vector.broadcast %cst_65 : f32 to vector<8x8xf32>
      %133 = arith.maximumf %131, %132 : vector<8x8xf32>
      %134 = vector.extract_strided_slice %3 {offsets = [8, 0, 0], sizes = [1, 8, 8], strides = [1, 1, 1]} : vector<9x8x8xf32> to vector<1x8x8xf32>
      %135 = vector.shape_cast %134 : vector<1x8x8xf32> to vector<8x8xf32>
      %cst_66 = arith.constant dense<0.000000e+00> : vector<8x8xf32>
      %136 = tpu.matmul %133, %135, %cst_66 {dimension_numbers = #tpu.dot_dimension_numbers<[1], [0], [0], [1], [0, 0, 1, 1], [], []>} : vector<8x8xf32>, vector<8x8xf32>, vector<8x8xf32> -> vector<8x8xf32>
      %137 = arith.addf %123, %136 : vector<8x8xf32>
      %138 = vector.broadcast %2 : vector<1x8xf32> to vector<8x8xf32>
      %139 = arith.addf %137, %138 : vector<8x8xf32>
      %c0_67 = arith.constant 0 : index
      %140 = arith.index_cast %7 : i32 to index
      %c0_68 = arith.constant 0 : index
      %c0_69 = arith.constant 0 : index
      %141 = vector.load %arg8[%c0_67, %140, %c0_68, %c0_69] : memref<1x8x8x8xf32, #tpu.memory_space<vmem>>, vector<1x1x8x8xf32>
      %142 = vector.shape_cast %141 : vector<1x1x8x8xf32> to vector<8x8xf32>
      %143 = vector.shape_cast %139 : vector<8x8xf32> to vector<1x1x8x8xf32>
      tpu.vector_store %arg8[%c0_67, %140, %c0_68, %c0_69], %143 {strides = array<i32>} : memref<1x8x8x8xf32, #tpu.memory_space<vmem>>, vector<1x1x8x8xf32>,
    }
    %c8_i32_10 = arith.constant 8 : i32
    return
  }
  func.func @transform_0(%arg0: i32) -> (i32, i32, i32, i32) {
    %c0_i32 = arith.constant 0 : i32
    %c0_i32_0 = arith.constant 0 : i32
    %c0_i32_1 = arith.constant 0 : i32
    %c0_i32_2 = arith.constant 0 : i32
    return %arg0, %c0_i32, %c0_i32_0, %c0_i32_1 : i32, i32, i32, i32
  }
  func.func @transform_1(%arg0: i32) -> (i32, i32) {
    %c0_i32 = arith.constant 0 : i32
    %c0_i32_0 = arith.constant 0 : i32
    %c0_i32_1 = arith.constant 0 : i32
    return %c0_i32, %c0_i32_0 : i32, i32
  }
  func.func @transform_2(%arg0: i32) -> (i32, i32) {
    %c0_i32 = arith.constant 0 : i32
    %c0_i32_0 = arith.constant 0 : i32
    %c0_i32_1 = arith.constant 0 : i32
    return %c0_i32, %c0_i32_0 : i32, i32
  }
  func.func @transform_3(%arg0: i32) -> (i32, i32, i32) {
    %c0_i32 = arith.constant 0 : i32
    %c0_i32_0 = arith.constant 0 : i32
    %c0_i32_1 = arith.constant 0 : i32
    %c0_i32_2 = arith.constant 0 : i32
    return %c0_i32, %c0_i32_0, %c0_i32_1 : i32, i32, i32
  }
  func.func @transform_4(%arg0: i32) -> (i32, i32, i32, i32) {
    %c0_i32 = arith.constant 0 : i32
    %c0_i32_0 = arith.constant 0 : i32
    %c0_i32_1 = arith.constant 0 : i32
    %c0_i32_2 = arith.constant 0 : i32
    return %arg0, %c0_i32, %c0_i32_0, %c0_i32_1 : i32, i32, i32, i32
  }
  func.func @transform_5(%arg0: i32) -> (i32, i32) {
    %c0_i32 = arith.constant 0 : i32
    %c0_i32_0 = arith.constant 0 : i32
    %c0_i32_1 = arith.constant 0 : i32
    return %c0_i32, %c0_i32_0 : i32, i32
  }
  func.func @transform_6(%arg0: i32) -> (i32, i32) {
    %c0_i32 = arith.constant 0 : i32
    %c0_i32_0 = arith.constant 0 : i32
    %c0_i32_1 = arith.constant 0 : i32
    return %c0_i32, %c0_i32_0 : i32, i32
  }
  func.func @transform_7(%arg0: i32) -> (i32, i32, i32, i32) {
    %c0_i32 = arith.constant 0 : i32
    %c0_i32_0 = arith.constant 0 : i32
    %c0_i32_1 = arith.constant 0 : i32
    %c0_i32_2 = arith.constant 0 : i32
    return %arg0, %c0_i32, %c0_i32_0, %c0_i32_1 : i32, i32, i32, i32
  }
}

</mosaic_0001>

<llo_original>
// kernel: res_block_forward.3
$region0: #{res_block_forward.3}
  #allocation0 [shape = 'u32[]', space=smem, size = 0x4, offset = 0x4, fixed_abs, tag = 'smem constant byte address 0x4 - core index']
  #allocation1 [shape = 'u32[72,128]{1,0:T(1,128)}', space=vmem, size = 0x9000, scoped, tag = 'internal scratch']
  %s0 = inlined_call_operand.vmem [shape: f32[16,128], index: 0, kind: input, shape index: {}]
  %s1 = inlined_call_operand.vmem [shape: f32[1,1,128], index: 1, kind: output, shape index: {0}]
  %s2 = inlined_call_operand.vmem [shape: f32[1,1,128], index: 2, kind: output, shape index: {1}]
  %3 = xla_tuple %s1, %s2
  %s4 = sld [smem:[#allocation0]]
  $region22: #{res_block_forward.3} parent=0
    _
  %s6 = ssub.s32 1, %s4
  %s7 = scalar_select 0, %s6, %s4
  // Predicated region
  $region2: #{res_block_forward.3} parent=0 // pred_check
    _
  $region3: #{res_block_forward.3} parent=0 // pred_check_branch
    %9 = sbr.rel (0) target = $region5
  $region4: #{res_block_forward.3} parent=0 // pred_region
    _
  $region5: #{res_block_forward.3} parent=0 // pred_fallthru
    _
  %v10 = vld [vmem:[%s0] sm:$0xff]
  %v11 = vld [vmem:[%s0 + $0x8] sm:$0xff]
  %v12 = vadd.f32 %v10, %v11
  %v13 = vrot.slane %v12, 4
  %v14 = vadd.f32 %v12, %v13
  %v15 = vrot.slane %v14, 2
  %v16 = vadd.f32 %v14, %v15
  %v17 = vrot.slane %v16, 1
  %v18 = vadd.f32 %v16, %v17
  %19 = vst [vmem:[%s1] sm:$0x1] %v18
  %v20 = vmul.f32 %v10, %v10
  %v21 = vmul.f32 %v11, %v11
  %v22 = vadd.f32 %v20, %v21
  %v23 = vrot.slane %v22, 4
  %v24 = vadd.f32 %v22, %v23
  %v25 = vrot.slane %v24, 2
  %v26 = vadd.f32 %v24, %v25
  %v27 = vrot.slane %v26, 1
  %v28 = vadd.f32 %v26, %v27
  %29 = vst [vmem:[%s2] sm:$0x1] %v28
  // Predicated region
  $region6: #{res_block_forward.3} parent=0 // pred_check
    _
  $region7: #{res_block_forward.3} parent=0 // pred_check_branch
    %31 = sbr.rel (0) target = $region9
  $region8: #{res_block_forward.3} parent=0 // pred_region
    _
  $region9: #{res_block_forward.3} parent=0 // pred_fallthru
    _
  // Predicated region
  $region10: #{res_block_forward.3} parent=0 // pred_check
    _
  $region11: #{res_block_forward.3} parent=0 // pred_check_branch
    %33 = sbr.rel (0) target = $region13
  $region12: #{res_block_forward.3} parent=0 // pred_region
    _
  $region13: #{res_block_forward.3} parent=0 // pred_fallthru
    _
  // Predicated region
  $region14: #{res_block_forward.3} parent=0 // pred_check
    _
  $region15: #{res_block_forward.3} parent=0 // pred_check_branch
    %35 = sbr.rel (0) target = $region17
  $region16: #{res_block_forward.3} parent=0 // pred_region
    _
  $region17: #{res_block_forward.3} parent=0 // pred_fallthru
    _
  // Predicated region
  $region18: #{res_block_forward.3} parent=0 // pred_check
    _
  $region19: #{res_block_forward.3} parent=0 // pred_check_branch
    %37 = sbr.rel (0) target = $region21
  $region20: #{res_block_forward.3} parent=0 // pred_region
    _
  $region21: #{res_block_forward.3} parent=0 // pred_fallthru
    _

// kernel: res_block_forward.4
$region0: #{res_block_forward.4}
  #allocation0 [shape = 'u32[]', space=smem, size = 0x4, offset = 0x4, fixed_abs, tag = 'smem constant byte address 0x4 - core index']
  #allocation1 [shape = 'u32[72,128]{1,0:T(1,128)}', space=vmem, size = 0x9000, scoped, tag = 'internal scratch']
  %s0 = inlined_call_operand.vmem [shape: f32[2,36,9,4], index: 0, kind: input, shape index: {}]
  %s1 = inlined_call_operand.vmem [shape: f32[1,4], index: 1, kind: input, shape index: {}]
  %s2 = inlined_call_operand.vmem [shape: f32[1,4], index: 2, kind: input, shape index: {}]
  %s3 = inlined_call_operand.vmem [shape: f32[9,4,8], index: 3, kind: input, shape index: {}]
  %s4 = inlined_call_operand.vmem [shape: f32[1,8], index: 4, kind: input, shape index: {}]
  %s5 = inlined_call_operand.vmem [shape: f32[2,8,8,8], index: 5, kind: output, shape index: {0}]
  %s6 = inlined_call_operand.vmem [shape: f32[2,1,8], index: 6, kind: output, shape index: {1}]
  %s7 = inlined_call_operand.vmem [shape: f32[2,1,8], index: 7, kind: output, shape index: {2}]
  %8 = xla_tuple %s5, %s6, %s7
  %s9 = sld [smem:[#allocation0]]
  $region76: #{res_block_forward.4} parent=0
    _
  %s11 = ssub.s32 1, %s9
  %s12 = scalar_select 0, %s11, %s9
  loop: start=0, step=1, limit=4
  $region2: #{res_block_forward.4} parent=0 // loop_pre_header
    _
  $region3: #{res_block_forward.4} parent=0 // loop_header
    %s14 = sphi 0, %s18
    %p15 = scmp.ge.s32.totalorder %s14, 4
    %s24 = sphi 0, %s26
    %s27 = sphi 0, %s24
    %s28 = sphi 0, %s27
    %s44 = sphi 0, %s28
    %s48 = sphi 0, %s48
    %s50 = sphi 0, %s48
    %s51 = sphi 0, %s50
    %s65 = sphi 0, %s51
    %s69 = sphi 0, %s69
    %s71 = sphi 0, %s69
    %s72 = sphi 0, %s71
    %s86 = sphi 0, %s72
    %s90 = sphi 0, %s90
    %s92 = sphi 0, %s90
    %s93 = sphi 0, %s92
    %s107 = sphi 0, %s93
    %s111 = sphi 0, %s111
    %s113 = sphi 0, %s111
    %s114 = sphi 0, %s113
    %s128 = sphi 0, %s114
    %s134 = sphi 0, %s136
    %s137 = sphi 0, %s134
    %s138 = sphi 0, %s137
    %s154 = sphi 0, %s138
    %s160 = sphi 0, %s162
    %s163 = sphi 0, %s160
    %s164 = sphi 0, %s163
    %s180 = sphi 0, %s164
    %s186 = sphi 0, %s188
    %s189 = sphi 0, %s186
    %s190 = sphi 0, %s189
    %s206 = sphi 0, %s190
  $region4: #{res_block_forward.4} parent=0 // loop_header_branch
    %17 = sbr.rel (%p15) target = $region8
  $region5: #{res_block_forward.4} parent=0 // loop_body
    %s19 = ssub.s32 %s14, 1
    %s20 = ssub.s32 %s14, 2
    %s21 = sadd.s32 %s14, 1
    %s22 = ssub.s32 %s14, %s21
    %p23 = scmp.eq.s32.totalorder %s22, 0
    %s25 = sadd.s32 %s24, 1
    %s26 = scalar_select %p23, %s24, %s25
    %p29 = pneg %p23
    %p30 = scmp.eq.s32.totalorder %s14, 1
    %p31 = por %p29, %p30
    %p32 = scmp.ne.s32.totalorder %s24, %s27
    %p33 = scmp.eq.s32.totalorder %s14, 0
    %p34 = por %p32, %p33
    %p35 = scmp.ne.s32.totalorder %s24, %s27
    %p36 = scmp.eq.s32.totalorder %s19, 1
    %p37 = por %p35, %p36
    %p38 = scmp.ne.s32.totalorder %s27, %s28
    %p39 = scmp.eq.s32.totalorder %s19, 0
    %p40 = por %p38, %p39
    %p41 = scmp.ne.s32.totalorder %s27, %s28
    %p42 = scmp.eq.s32.totalorder %s20, 1
    %p43 = por %p41, %p42
    %p45 = scmp.ne.s32.totalorder %s28, %s44
    %p46 = scmp.eq.s32.totalorder %s20, 0
    %p47 = por %p45, %p46
    %s49 = sadd.s32 %s48, 1
    %p52 = scmp.eq.s32.totalorder %s14, 1
    %p53 = scmp.ne.s32.totalorder %s48, %s50
    %p54 = scmp.eq.s32.totalorder %s14, 0
    %p55 = por %p53, %p54
    %p56 = scmp.ne.s32.totalorder %s48, %s50
    %p57 = scmp.eq.s32.totalorder %s19, 1
    %p58 = por %p56, %p57
    %p59 = scmp.ne.s32.totalorder %s50, %s51
    %p60 = scmp.eq.s32.totalorder %s19, 0
    %p61 = por %p59, %p60
    %p62 = scmp.ne.s32.totalorder %s50, %s51
    %p63 = scmp.eq.s32.totalorder %s20, 1
    %p64 = por %p62, %p63
    %p66 = scmp.ne.s32.totalorder %s51, %s65
    %p67 = scmp.eq.s32.totalorder %s20, 0
    %p68 = por %p66, %p67
    %s70 = sadd.s32 %s69, 1
    %p73 = scmp.eq.s32.totalorder %s14, 1
    %p74 = scmp.ne.s32.totalorder %s69, %s71
    %p75 = scmp.eq.s32.totalorder %s14, 0
    %p76 = por %p74, %p75
    %p77 = scmp.ne.s32.totalorder %s69, %s71
    %p78 = scmp.eq.s32.totalorder %s19, 1
    %p79 = por %p77, %p78
    %p80 = scmp.ne.s32.totalorder %s71, %s72
    %p81 = scmp.eq.s32.totalorder %s19, 0
    %p82 = por %p80, %p81
    %p83 = scmp.ne.s32.totalorder %s71, %s72
    %p84 = scmp.eq.s32.totalorder %s20, 1
    %p85 = por %p83, %p84
    %p87 = scmp.ne.s32.totalorder %s72, %s86
    %p88 = scmp.eq.s32.totalorder %s20, 0
    %p89 = por %p87, %p88
    %s91 = sadd.s32 %s90, 1
    %p94 = scmp.eq.s32.totalorder %s14, 1
    %p95 = scmp.ne.s32.totalorder %s90, %s92
    %p96 = scmp.eq.s32.totalorder %s14, 0
    %p97 = por %p95, %p96
    %p98 = scmp.ne.s32.totalorder %s90, %s92
    %p99 = scmp.eq.s32.totalorder %s19, 1
    %p100 = por %p98, %p99
    %p101 = scmp.ne.s32.totalorder %s92, %s93
    %p102 = scmp.eq.s32.totalorder %s19, 0
    %p103 = por %p101, %p102
    %p104 = scmp.ne.s32.totalorder %s92, %s93
    %p105 = scmp.eq.s32.totalorder %s20, 1
    %p106 = por %p104, %p105
    %p108 = scmp.ne.s32.totalorder %s93, %s107
    %p109 = scmp.eq.s32.totalorder %s20, 0
    %p110 = por %p108, %p109
    %s112 = sadd.s32 %s111, 1
    %p115 = scmp.eq.s32.totalorder %s14, 1
    %p116 = scmp.ne.s32.totalorder %s111, %s113
    %p117 = scmp.eq.s32.totalorder %s14, 0
    %p118 = por %p116, %p117
    %p119 = scmp.ne.s32.totalorder %s111, %s113
    %p120 = scmp.eq.s32.totalorder %s19, 1
    %p121 = por %p119, %p120
    %p122 = scmp.ne.s32.totalorder %s113, %s114
    %p123 = scmp.eq.s32.totalorder %s19, 0
    %p124 = por %p122, %p123
    %p125 = scmp.ne.s32.totalorder %s113, %s114
    %p126 = scmp.eq.s32.totalorder %s20, 1
    %p127 = por %p125, %p126
    %p129 = scmp.ne.s32.totalorder %s114, %s128
    %p130 = scmp.eq.s32.totalorder %s20, 0
    %p131 = por %p129, %p130
    %s132 = ssub.s32 %s14, %s21
    %p133 = scmp.eq.s32.totalorder %s132, 0
    %s135 = sadd.s32 %s134, 1
    %s136 = scalar_select %p133, %s134, %s135
    %p139 = pneg %p133
    %p140 = scmp.eq.s32.totalorder %s14, 1
    %p141 = por %p139, %p140
    %p142 = scmp.ne.s32.totalorder %s134, %s137
    %p143 = scmp.eq.s32.totalorder %s14, 0
    %p144 = por %p142, %p143
    %p145 = scmp.ne.s32.totalorder %s134, %s137
    %p146 = scmp.eq.s32.totalorder %s19, 1
    %p147 = por %p145, %p146
    %p148 = scmp.ne.s32.totalorder %s137, %s138
    %p149 = scmp.eq.s32.totalorder %s19, 0
    %p150 = por %p148, %p149
    %p151 = scmp.ne.s32.totalorder %s137, %s138
    %p152 = scmp.eq.s32.totalorder %s20, 1
    %p153 = por %p151, %p152
    %p155 = scmp.ne.s32.totalorder %s138, %s154
    %p156 = scmp.eq.s32.totalorder %s20, 0
    %p157 = por %p155, %p156
    %s158 = ssub.s32 %s14, %s21
    %p159 = scmp.eq.s32.totalorder %s158, 0
    %s161 = sadd.s32 %s160, 1
    %s162 = scalar_select %p159, %s160, %s161
    %p165 = pneg %p159
    %p166 = scmp.eq.s32.totalorder %s14, 1
    %p167 = por %p165, %p166
    %p168 = scmp.ne.s32.totalorder %s160, %s163
    %p169 = scmp.eq.s32.totalorder %s14, 0
    %p170 = por %p168, %p169
    %p171 = scmp.ne.s32.totalorder %s160, %s163
    %p172 = scmp.eq.s32.totalorder %s19, 1
    %p173 = por %p171, %p172
    %p174 = scmp.ne.s32.totalorder %s163, %s164
    %p175 = scmp.eq.s32.totalorder %s19, 0
    %p176 = por %p174, %p175
    %p177 = scmp.ne.s32.totalorder %s163, %s164
    %p178 = scmp.eq.s32.totalorder %s20, 1
    %p179 = por %p177, %p178
    %p181 = scmp.ne.s32.totalorder %s164, %s180
    %p182 = scmp.eq.s32.totalorder %s20, 0
    %p183 = por %p181, %p182
    %s184 = ssub.s32 %s14, %s21
    %p185 = scmp.eq.s32.totalorder %s184, 0
    %s187 = sadd.s32 %s186, 1
    %s188 = scalar_select %p185, %s186, %s187
    %p191 = pneg %p185
    %p192 = scmp.eq.s32.totalorder %s14, 1
    %p193 = por %p191, %p192
    %p194 = scmp.ne.s32.totalorder %s186, %s189
    %p195 = scmp.eq.s32.totalorder %s14, 0
    %p196 = por %p194, %p195
    %p197 = scmp.ne.s32.totalorder %s186, %s189
    %p198 = scmp.eq.s32.totalorder %s19, 1
    %p199 = por %p197, %p198
    %p200 = scmp.ne.s32.totalorder %s189, %s190
    %p201 = scmp.eq.s32.totalorder %s19, 0
    %p202 = por %p200, %p201
    %p203 = scmp.ne.s32.totalorder %s189, %s190
    %p204 = scmp.eq.s32.totalorder %s20, 1
    %p205 = por %p203, %p204
    %p207 = scmp.ne.s32.totalorder %s190, %s206
    %p208 = scmp.eq.s32.totalorder %s20, 0
    %p209 = por %p207, %p208
    %p210 = scmp.le.s32.totalorder 1, %s14
    %p211 = scmp.lt.s32.totalorder %s14, 3
    %p212 = pnand %p210, %p211
    %p213 = pneg %p212
    // Predicated region
    $region9: #{res_block_forward.4} parent=5 // pred_check
      _
    $region10: #{res_block_forward.4} parent=5 // pred_check_branch
      %215 = sbr.rel (%p212) target = $region12
    $region11: #{res_block_forward.4} parent=5 // pred_region
      %s216 = ssub.s32 %s14, 1
      // Predicated region
      $region13: #{res_block_forward.4} parent=11 // pred_check
        %p217 = pneg %p61
      $region14: #{res_block_forward.4} parent=11 // pred_check_branch
        %219 = sbr.rel (%p217) target = $region16
      $region15: #{res_block_forward.4} parent=11 // pred_region
        _
      $region16: #{res_block_forward.4} parent=11 // pred_fallthru
        _
      // Predicated region
      $region17: #{res_block_forward.4} parent=11 // pred_check
        %p220 = pneg %p82
      $region18: #{res_block_forward.4} parent=11 // pred_check_branch
        %222 = sbr.rel (%p220) target = $region20
      $region19: #{res_block_forward.4} parent=11 // pred_region
        _
      $region20: #{res_block_forward.4} parent=11 // pred_fallthru
        _
      // Predicated region
      $region21: #{res_block_forward.4} parent=11 // pred_check
        %p223 = pneg %p103
      $region22: #{res_block_forward.4} parent=11 // pred_check_branch
        %225 = sbr.rel (%p223) target = $region24
      $region23: #{res_block_forward.4} parent=11 // pred_region
        _
      $region24: #{res_block_forward.4} parent=11 // pred_fallthru
        _
      // Predicated region
      $region25: #{res_block_forward.4} parent=11 // pred_check
        %p226 = pneg %p124
      $region26: #{res_block_forward.4} parent=11 // pred_check_branch
        %228 = sbr.rel (%p226) target = $region28
      $region27: #{res_block_forward.4} parent=11 // pred_region
        _
      $region28: #{res_block_forward.4} parent=11 // pred_fallthru
        _
    $region12: #{res_block_forward.4} parent=5 // pred_fallthru
      _
    %p229 = scmp.lt.s32.totalorder %s14, 2
    // Predicated region
    $region29: #{res_block_forward.4} parent=5 // pred_check
      %p230 = pneg %p229
    $region30: #{res_block_forward.4} parent=5 // pred_check_branch
      %232 = sbr.rel (%p230) target = $region32
    $region31: #{res_block_forward.4} parent=5 // pred_region
      // Predicated region
      $region33: #{res_block_forward.4} parent=31 // pred_check
        %p233 = pneg %p34
      $region34: #{res_block_forward.4} parent=31 // pred_check_branch
        %235 = sbr.rel (%p233) target = $region36
      $region35: #{res_block_forward.4} parent=31 // pred_region
        %p236 = scmp.lt.s32.totalorder %s14, 1
        %s237 = scalar_select %p236, %s14, 1
        %s238 = smul.addr %s237, 72
        %s239 = smul.addr %s238, 8
        %s240 = scalar_lea.vmem %s0, %s239
      $region36: #{res_block_forward.4} parent=31 // pred_fallthru
        _
    $region32: #{res_block_forward.4} parent=5 // pred_fallthru
      _
    %p241 = scmp.le.s32.totalorder 1, %s14
    %p242 = scmp.lt.s32.totalorder %s14, 3
    %p243 = pnand %p241, %p242
    %p244 = pneg %p243
    // Predicated region
    $region37: #{res_block_forward.4} parent=5 // pred_check
      _
    $region38: #{res_block_forward.4} parent=5 // pred_check_branch
      %246 = sbr.rel (%p243) target = $region40
    $region39: #{res_block_forward.4} parent=5 // pred_region
      %s247 = ssub.s32 %s14, 1
      %p248 = scmp.lt.s32.totalorder %s19, 1
      %s249 = scalar_select %p248, %s19, 1
      %s250 = smul.addr %s249, 72
      %s251 = smul.addr %s250, 8
      %s252 = scalar_lea.vmem %s0, %s251
      %p253 = pneg %p40
      %p254 = pneg %p37
      %p255 = pneg %p61
      %p256 = pneg %p58
      %p257 = pneg %p82
      %p258 = pneg %p79
      %p259 = pneg %p103
      %p260 = pneg %p100
      %p261 = pneg %p124
      %p262 = pneg %p121
      %p263 = pneg %p150
      %p264 = pneg %p147
      %p265 = scmp.lt.s32.totalorder %s19, 1
      %s266 = scalar_select %p265, %s19, 1
      %s267 = smul.addr %s266, 8
      %s268 = smul.addr %s267, 8
      %s269 = scalar_lea.vmem %s5, %s268
      %p270 = pneg %p176
      %p271 = pneg %p173
      %p272 = scmp.lt.s32.totalorder %s19, 1
      %s273 = scalar_select %p272, %s19, 1
      %s274 = scalar_lea.vmem %s6, %s273
      %p275 = pneg %p202
      %p276 = pneg %p199
      %p277 = scmp.lt.s32.totalorder %s19, 1
      %s278 = scalar_select %p277, %s19, 1
      %s279 = scalar_lea.vmem %s7, %s278
      %p280 = scmp.lt.s32.totalorder %s19, 1
      %s281 = scalar_select %p280, %s19, 1
      %s282 = smul.addr %s281, 72
      %s283 = smul.addr %s282, 8
      %s284 = scalar_lea.vmem %s0, %s283
      %p285 = scmp.lt.s32.totalorder %s19, 1
      %s286 = scalar_select %p285, %s19, 1
      %s287 = smul.addr %s286, 8
      %s288 = smul.addr %s287, 8
      %s289 = scalar_lea.vmem %s5, %s288
      %p290 = scmp.lt.s32.totalorder %s19, 1
      %s291 = scalar_select %p290, %s19, 1
      %s292 = scalar_lea.vmem %s6, %s291
      %p293 = scmp.lt.s32.totalorder %s19, 1
      %s294 = scalar_select %p293, %s19, 1
      %s295 = scalar_lea.vmem %s7, %s294
      %v296 = vld [vmem:[%s1] sm:$0x1]
      %v297 = vld [vmem:[%s2] sm:$0x1]
      %v298 = vld [vmem:[%s4] sm:$0x1]
      %v299 = vld [vmem:[%s3] sm:$0xf]
      %v300 = vld [vmem:[%s3 + $0x4] sm:$0xf]
      %v301 = vld [vmem:[%s3 + $0x8] sm:$0xf]
      %v302 = vld [vmem:[%s3 + $0xc] sm:$0xf]
      %v303 = vld [vmem:[%s3 + $0x10] sm:$0xf]
      %v304 = vld [vmem:[%s3 + $0x14] sm:$0xf]
      %v305 = vld [vmem:[%s3 + $0x18] sm:$0xf]
      %v306 = vld [vmem:[%s3 + $0x1c] sm:$0xf]
      %v307 = vld [vmem:[%s3 + $0x20] sm:$0xf]
      %vm308 = vcmask 57344
      %309 = vst.msk [vmem:[%s292] sm:$0x1] %vm308, 0.0
      %310 = vst.msk [vmem:[%s295] sm:$0x1] %vm308, 0.0
      loop: start=0, step=1, limit=8
      $region41: #{res_block_forward.4} parent=39 // loop_pre_header
        _
      $region42: #{res_block_forward.4} parent=39 // loop_header
        %s312 = sphi 0, %s316
        %p313 = scmp.ge.s32.totalorder %s312, 8
      $region43: #{res_block_forward.4} parent=39 // loop_header_branch
        %315 = sbr.rel (%p313) target = $region47
      $region44: #{res_block_forward.4} parent=39 // loop_body
        %s317 = smul.u32 %s312, 4
        %s318 = smul.u32 %s317, 16
        %s319 = scalar_lea.vmem %s284, %s318
        %v320 = vld [vmem:[%s319] sm:$0xff]
        %v322 = vperm.slane %v296, 0
        %v324 = vmul.f32 %v320, %v322
        %v326 = vperm.slane %v297, 0
        %v328 = vadd.f32 %v324, %v326
        %v329 = vmax.f32 %v328, 0.0
        %s330 = sadd.s32 %s317, 1
        %s331 = smul.u32 %s330, 16
        %s332 = scalar_lea.vmem %s284, %s331
        %v333 = vld [vmem:[%s332] sm:$0xff]
        %v334 = vmul.f32 %v333, %v322
        %v335 = vadd.f32 %v334, %v326
        %v336 = vmax.f32 %v335, 0.0
        %vm337 = vcmask 31744
        %v339 = vsel %vm337, %v336, 0
        %vm341 = vcmask 1043456
        %v343 = vsel %vm341, %v300, 0
        %345 = vmatpush.msra.mxu0 0.0
        %346 = vmatpush.msra.mxu0 0.0
        %347 = vmatpush.msra.mxu0 0.0
        %348 = vmatpush.msra.mxu0 0.0
        %349 = vmatpush.msra.mxu0 0.0
        %350 = vmatpush.msra.mxu0 0.0
        %351 = vmatpush.msra.mxu0 0.0
        %352 = vmatpush.msra.mxu0 0.0
        %353 = vmatpush.msra.mxu0 0.0
        %354 = vmatpush.msra.mxu0 0.0
        %355 = vmatpush.msra.mxu0 0.0
        %356 = vmatpush.msra.mxu0 0.0
        %357 = vmatpush.msra.mxu0 0.0
        %358 = vmatpush.msra.mxu0 0.0
        %359 = vmatpush.msra.mxu0 0.0
        %360 = vmatpush.msra.mxu0 %v343
        %361 = vmatmul.f32.gmra.mxu0 %v339
        %v362 = vpop.f32.mrf.mxu0
        %v363 = vadd.f32 0.0, %v362
        %364 = vdwg.mxu0
        %v366 = vsel %vm337, %v329, 0
        %v369 = vsel %vm341, %v299, 0
        %371 = vmatpush.msra.mxu0 0.0
        %372 = vmatpush.msra.mxu0 0.0
        %373 = vmatpush.msra.mxu0 0.0
        %374 = vmatpush.msra.mxu0 0.0
        %375 = vmatpush.msra.mxu0 0.0
        %376 = vmatpush.msra.mxu0 0.0
        %377 = vmatpush.msra.mxu0 0.0
        %378 = vmatpush.msra.mxu0 0.0
        %379 = vmatpush.msra.mxu0 0.0
        %380 = vmatpush.msra.mxu0 0.0
        %381 = vmatpush.msra.mxu0 0.0
        %382 = vmatpush.msra.mxu0 0.0
        %383 = vmatpush.msra.mxu0 0.0
        %384 = vmatpush.msra.mxu0 0.0
        %385 = vmatpush.msra.mxu0 0.0
        %386 = vmatpush.msra.mxu0 %v369
        %387 = vmatmul.f32.gmra.mxu0 %v366
        %v388 = vpop.f32.mrf.mxu0
        %v389 = vadd.f32 %v363, %v388
        %390 = vdwg.mxu0
        %v391 = vld [vmem:[%s319 + $0x1] sm:$0xff]
        %v392 = vmul.f32 %v391, %v322
        %v393 = vadd.f32 %v392, %v326
        %v394 = vmax.f32 %v393, 0.0
        %v396 = vsel %vm337, %v394, 0
        %v399 = vsel %vm341, %v301, 0
        %401 = vmatpush.msra.mxu0 0.0
        %402 = vmatpush.msra.mxu0 0.0
        %403 = vmatpush.msra.mxu0 0.0
        %404 = vmatpush.msra.mxu0 0.0
        %405 = vmatpush.msra.mxu0 0.0
        %406 = vmatpush.msra.mxu0 0.0
        %407 = vmatpush.msra.mxu0 0.0
        %408 = vmatpush.msra.mxu0 0.0
        %409 = vmatpush.msra.mxu0 0.0
        %410 = vmatpush.msra.mxu0 0.0
        %411 = vmatpush.msra.mxu0 0.0
        %412 = vmatpush.msra.mxu0 0.0
        %413 = vmatpush.msra.mxu0 0.0
        %414 = vmatpush.msra.mxu0 0.0
        %415 = vmatpush.msra.mxu0 0.0
        %416 = vmatpush.msra.mxu0 %v399
        %417 = vmatmul.f32.gmra.mxu0 %v396
        %v418 = vpop.f32.mrf.mxu0
        %v419 = vadd.f32 0.0, %v418
        %420 = vdwg.mxu0
        %v421 = vadd.f32 %v389, %v419
        %s422 = smul.u32 %s312, 2
        %s423 = sadd.s32 %s422, 1
        %s424 = smul.u32 %s423, 2
        %s425 = smul.u32 %s424, 16
        %s426 = scalar_lea.vmem %s284, %s425
        %v427 = vld [vmem:[%s426] sm:$0xff]
        %v428 = vmul.f32 %v427, %v322
        %v429 = vadd.f32 %v428, %v326
        %v430 = vmax.f32 %v429, 0.0
        %v432 = vsel %vm337, %v430, 0
        %v435 = vsel %vm341, %v302, 0
        %437 = vmatpush.msra.mxu0 0.0
        %438 = vmatpush.msra.mxu0 0.0
        %439 = vmatpush.msra.mxu0 0.0
        %440 = vmatpush.msra.mxu0 0.0
        %441 = vmatpush.msra.mxu0 0.0
        %442 = vmatpush.msra.mxu0 0.0
        %443 = vmatpush.msra.mxu0 0.0
        %444 = vmatpush.msra.mxu0 0.0
        %445 = vmatpush.msra.mxu0 0.0
        %446 = vmatpush.msra.mxu0 0.0
        %447 = vmatpush.msra.mxu0 0.0
        %448 = vmatpush.msra.mxu0 0.0
        %449 = vmatpush.msra.mxu0 0.0
        %450 = vmatpush.msra.mxu0 0.0
        %451 = vmatpush.msra.mxu0 0.0
        %452 = vmatpush.msra.mxu0 %v435
        %453 = vmatmul.f32.gmra.mxu0 %v432
        %v454 = vpop.f32.mrf.mxu0
        %v455 = vadd.f32 0.0, %v454
        %456 = vdwg.mxu0
        %v457 = vadd.f32 %v421, %v455
        %s458 = sadd.s32 %s424, 1
        %s459 = smul.u32 %s458, 16
        %s460 = scalar_lea.vmem %s284, %s459
        %v461 = vld [vmem:[%s460] sm:$0xff]
        %v462 = vmul.f32 %v461, %v322
        %v463 = vadd.f32 %v462, %v326
        %v464 = vmax.f32 %v463, 0.0
        %v466 = vsel %vm337, %v464, 0
        %v469 = vsel %vm341, %v303, 0
        %471 = vmatpush.msra.mxu0 0.0
        %472 = vmatpush.msra.mxu0 0.0
        %473 = vmatpush.msra.mxu0 0.0
        %474 = vmatpush.msra.mxu0 0.0
        %475 = vmatpush.msra.mxu0 0.0
        %476 = vmatpush.msra.mxu0 0.0
        %477 = vmatpush.msra.mxu0 0.0
        %478 = vmatpush.msra.mxu0 0.0
        %479 = vmatpush.msra.mxu0 0.0
        %480 = vmatpush.msra.mxu0 0.0
        %481 = vmatpush.msra.mxu0 0.0
        %482 = vmatpush.msra.mxu0 0.0
        %483 = vmatpush.msra.mxu0 0.0
        %484 = vmatpush.msra.mxu0 0.0
        %485 = vmatpush.msra.mxu0 0.0
        %486 = vmatpush.msra.mxu0 %v469
        %487 = vmatmul.f32.gmra.mxu0 %v466
        %v488 = vpop.f32.mrf.mxu0
        %v489 = vadd.f32 0.0, %v488
        %490 = vdwg.mxu0
        %v491 = vadd.f32 %v457, %v489
        %v492 = vld [vmem:[%s426 + $0x1] sm:$0xff]
        %v493 = vmul.f32 %v492, %v322
        %v494 = vadd.f32 %v493, %v326
        %v495 = vmax.f32 %v494, 0.0
        %v497 = vsel %vm337, %v495, 0
        %v500 = vsel %vm341, %v304, 0
        %502 = vmatpush.msra.mxu0 0.0
        %503 = vmatpush.msra.mxu0 0.0
        %504 = vmatpush.msra.mxu0 0.0
        %505 = vmatpush.msra.mxu0 0.0
        %506 = vmatpush.msra.mxu0 0.0
        %507 = vmatpush.msra.mxu0 0.0
        %508 = vmatpush.msra.mxu0 0.0
        %509 = vmatpush.msra.mxu0 0.0
        %510 = vmatpush.msra.mxu0 0.0
        %511 = vmatpush.msra.mxu0 0.0
        %512 = vmatpush.msra.mxu0 0.0
        %513 = vmatpush.msra.mxu0 0.0
        %514 = vmatpush.msra.mxu0 0.0
        %515 = vmatpush.msra.mxu0 0.0
        %516 = vmatpush.msra.mxu0 0.0
        %517 = vmatpush.msra.mxu0 %v500
        %518 = vmatmul.f32.gmra.mxu0 %v497
        %v519 = vpop.f32.mrf.mxu0
        %v520 = vadd.f32 0.0, %v519
        %521 = vdwg.mxu0
        %v522 = vadd.f32 %v491, %v520
        %s523 = sadd.s32 %s422, 2
        %s524 = smul.u32 %s523, 2
        %s525 = smul.u32 %s524, 16
        %s526 = scalar_lea.vmem %s284, %s525
        %v527 = vld [vmem:[%s526] sm:$0xff]
        %v528 = vmul.f32 %v527, %v322
        %v529 = vadd.f32 %v528, %v326
        %v530 = vmax.f32 %v529, 0.0
        %v532 = vsel %vm337, %v530, 0
        %v535 = vsel %vm341, %v305, 0
        %537 = vmatpush.msra.mxu0 0.0
        %538 = vmatpush.msra.mxu0 0.0
        %539 = vmatpush.msra.mxu0 0.0
        %540 = vmatpush.msra.mxu0 0.0
        %541 = vmatpush.msra.mxu0 0.0
        %542 = vmatpush.msra.mxu0 0.0
        %543 = vmatpush.msra.mxu0 0.0
        %544 = vmatpush.msra.mxu0 0.0
        %545 = vmatpush.msra.mxu0 0.0
        %546 = vmatpush.msra.mxu0 0.0
        %547 = vmatpush.msra.mxu0 0.0
        %548 = vmatpush.msra.mxu0 0.0
        %549 = vmatpush.msra.mxu0 0.0
        %550 = vmatpush.msra.mxu0 0.0
        %551 = vmatpush.msra.mxu0 0.0
        %552 = vmatpush.msra.mxu0 %v535
        %553 = vmatmul.f32.gmra.mxu0 %v532
        %v554 = vpop.f32.mrf.mxu0
        %v555 = vadd.f32 0.0, %v554
        %556 = vdwg.mxu0
        %v557 = vadd.f32 %v522, %v555
        %s558 = sadd.s32 %s524, 1
        %s559 = smul.u32 %s558, 16
        %s560 = scalar_lea.vmem %s284, %s559
        %v561 = vld [vmem:[%s560] sm:$0xff]
        %v562 = vmul.f32 %v561, %v322
        %v563 = vadd.f32 %v562, %v326
        %v564 = vmax.f32 %v563, 0.0
        %v566 = vsel %vm337, %v564, 0
        %v569 = vsel %vm341, %v306, 0
        %571 = vmatpush.msra.mxu0 0.0
        %572 = vmatpush.msra.mxu0 0.0
        %573 = vmatpush.msra.mxu0 0.0
        %574 = vmatpush.msra.mxu0 0.0
        %575 = vmatpush.msra.mxu0 0.0
        %576 = vmatpush.msra.mxu0 0.0
        %577 = vmatpush.msra.mxu0 0.0
        %578 = vmatpush.msra.mxu0 0.0
        %579 = vmatpush.msra.mxu0 0.0
        %580 = vmatpush.msra.mxu0 0.0
        %581 = vmatpush.msra.mxu0 0.0
        %582 = vmatpush.msra.mxu0 0.0
        %583 = vmatpush.msra.mxu0 0.0
        %584 = vmatpush.msra.mxu0 0.0
        %585 = vmatpush.msra.mxu0 0.0
        %586 = vmatpush.msra.mxu0 %v569
        %587 = vmatmul.f32.gmra.mxu0 %v566
        %v588 = vpop.f32.mrf.mxu0
        %v589 = vadd.f32 0.0, %v588
        %590 = vdwg.mxu0
        %v591 = vadd.f32 %v557, %v589
        %v592 = vld [vmem:[%s526 + $0x1] sm:$0xff]
        %v593 = vmul.f32 %v592, %v322
        %v594 = vadd.f32 %v593, %v326
        %v595 = vmax.f32 %v594, 0.0
        %v597 = vsel %vm337, %v595, 0
        %v600 = vsel %vm341, %v307, 0
        %602 = vmatpush.msra.mxu0 0.0
        %603 = vmatpush.msra.mxu0 0.0
        %604 = vmatpush.msra.mxu0 0.0
        %605 = vmatpush.msra.mxu0 0.0
        %606 = vmatpush.msra.mxu0 0.0
        %607 = vmatpush.msra.mxu0 0.0
        %608 = vmatpush.msra.mxu0 0.0
        %609 = vmatpush.msra.mxu0 0.0
        %610 = vmatpush.msra.mxu0 0.0
        %611 = vmatpush.msra.mxu0 0.0
        %612 = vmatpush.msra.mxu0 0.0
        %613 = vmatpush.msra.mxu0 0.0
        %614 = vmatpush.msra.mxu0 0.0
        %615 = vmatpush.msra.mxu0 0.0
        %616 = vmatpush.msra.mxu0 0.0
        %617 = vmatpush.msra.mxu0 %v600
        %618 = vmatmul.f32.gmra.mxu0 %v597
        %v619 = vpop.f32.mrf.mxu0
        %v620 = vadd.f32 0.0, %v619
        %621 = vdwg.mxu0
        %v622 = vadd.f32 %v591, %v620
        %v624 = vperm.slane %v298, 0
        %v626 = vadd.f32 %v622, %v624
        %s627 = smul.u32 %s312, 8
        %s628 = scalar_lea.vmem %s289, %s627
        %vm629 = vcmask 64512
        %630 = vst.msk [vmem:[%s628] sm:$0xff] %vm629, %v626
        %v631 = vld [vmem:[%s292] sm:$0x1]
        %v632 = vsel %vm629, %v626, 0.0
        %v633 = vrot.slane %v632, 4
        %v634 = vadd.f32 %v632, %v633
        %v635 = vrot.slane %v634, 2
        %v636 = vadd.f32 %v634, %v635
        %v637 = vrot.slane %v636, 1
        %v638 = vadd.f32 %v636, %v637
        %v639 = vadd.f32 %v631, %v638
        %640 = vst.msk [vmem:[%s292] sm:$0x1] %vm308, %v639
        %v641 = vld [vmem:[%s295] sm:$0x1]
        %v642 = vmul.f32 %v626, %v626
        %v643 = vsel %vm629, %v642, 0.0
        %v644 = vrot.slane %v643, 4
        %v645 = vadd.f32 %v643, %v644
        %v646 = vrot.slane %v645, 2
        %v647 = vadd.f32 %v645, %v646
        %v648 = vrot.slane %v647, 1
        %v649 = vadd.f32 %v647, %v648
        %v650 = vadd.f32 %v641, %v649
        %651 = vst.msk [vmem:[%s295] sm:$0x1] %vm308, %v650
      $region45: #{res_block_forward.4} parent=39 // loop_footer
        %s316 = sadd.s32 1, %s312
      $region46: #{res_block_forward.4} parent=39 // loop_footer_branch
        %311 = sbr.rel target = $region42
      $region47: #{res_block_forward.4} parent=39 // loop_exit
        _
      %p652 = scmp.lt.s32.totalorder %s19, 1
      %s653 = scalar_select %p652, %s19, 1
      %s654 = smul.addr %s653, 8
      %s655 = smul.addr %s654, 8
      %s656 = scalar_lea.vmem %s5, %s655
      %p657 = scmp.lt.s32.totalorder %s19, 1
      %s658 = scalar_select %p657, %s19, 1
      %s659 = scalar_lea.vmem %s6, %s658
      %p660 = scmp.lt.s32.totalorder %s19, 1
      %s661 = scalar_select %p660, %s19, 1
      %s662 = scalar_lea.vmem %s7, %s661
      // Predicated region
      $region48: #{res_block_forward.4} parent=39 // pred_check
        %p663 = pneg %p147
      $region49: #{res_block_forward.4} parent=39 // pred_check_branch
        %665 = sbr.rel (%p663) target = $region51
      $region50: #{res_block_forward.4} parent=39 // pred_region
        _
      $region51: #{res_block_forward.4} parent=39 // pred_fallthru
        _
      // Predicated region
      $region52: #{res_block_forward.4} parent=39 // pred_check
        %p666 = pneg %p173
      $region53: #{res_block_forward.4} parent=39 // pred_check_branch
        %668 = sbr.rel (%p666) target = $region55
      $region54: #{res_block_forward.4} parent=39 // pred_region
        _
      $region55: #{res_block_forward.4} parent=39 // pred_fallthru
        _
      // Predicated region
      $region56: #{res_block_forward.4} parent=39 // pred_check
        %p669 = pneg %p199
      $region57: #{res_block_forward.4} parent=39 // pred_check_branch
        %671 = sbr.rel (%p669) target = $region59
      $region58: #{res_block_forward.4} parent=39 // pred_region
        _
      $region59: #{res_block_forward.4} parent=39 // pred_fallthru
        _
    $region40: #{res_block_forward.4} parent=5 // pred_fallthru
      _
    %p672 = scmp.le.s32.totalorder 2, %s14
    // Predicated region
    $region60: #{res_block_forward.4} parent=5 // pred_check
      %p673 = pneg %p672
    $region61: #{res_block_forward.4} parent=5 // pred_check_branch
      %675 = sbr.rel (%p673) target = $region63
    $region62: #{res_block_forward.4} parent=5 // pred_region
      %s676 = ssub.s32 %s14, 2
      // Predicated region
      $region64: #{res_block_forward.4} parent=62 // pred_check
        %p677 = pneg %p153
      $region65: #{res_block_forward.4} parent=62 // pred_check_branch
        %679 = sbr.rel (%p677) target = $region67
      $region66: #{res_block_forward.4} parent=62 // pred_region
        %p680 = scmp.lt.s32.totalorder %s20, 1
        %s681 = scalar_select %p680, %s20, 1
        %s682 = smul.addr %s681, 8
        %s683 = smul.addr %s682, 8
        %s684 = scalar_lea.vmem %s5, %s683
      $region67: #{res_block_forward.4} parent=62 // pred_fallthru
        _
      // Predicated region
      $region68: #{res_block_forward.4} parent=62 // pred_check
        %p685 = pneg %p179
      $region69: #{res_block_forward.4} parent=62 // pred_check_branch
        %687 = sbr.rel (%p685) target = $region71
      $region70: #{res_block_forward.4} parent=62 // pred_region
        %p688 = scmp.lt.s32.totalorder %s20, 1
        %s689 = scalar_select %p688, %s20, 1
        %s690 = scalar_lea.vmem %s6, %s689
      $region71: #{res_block_forward.4} parent=62 // pred_fallthru
        _
      // Predicated region
      $region72: #{res_block_forward.4} parent=62 // pred_check
        %p691 = pneg %p205
      $region73: #{res_block_forward.4} parent=62 // pred_check_branch
        %693 = sbr.rel (%p691) target = $region75
      $region74: #{res_block_forward.4} parent=62 // pred_region
        %p694 = scmp.lt.s32.totalorder %s20, 1
        %s695 = scalar_select %p694, %s20, 1
        %s696 = scalar_lea.vmem %s7, %s695
      $region75: #{res_block_forward.4} parent=62 // pred_fallthru
        _
    $region63: #{res_block_forward.4} parent=5 // pred_fallthru
      _
  $region6: #{res_block_forward.4} parent=0 // loop_footer
    %s18 = sadd.s32 1, %s14
  $region7: #{res_block_forward.4} parent=0 // loop_footer_branch
    %13 = sbr.rel target = $region3
  $region8: #{res_block_forward.4} parent=0 // loop_exit
    _

// kernel: res_block_forward.5
$region0: #{res_block_forward.5}
  #allocation0 [shape = 'u32[]', space=smem, size = 0x4, offset = 0x4, fixed_abs, tag = 'smem constant byte address 0x4 - core index']
  #allocation1 [shape = 'u32[72,128]{1,0:T(1,128)}', space=vmem, size = 0x9000, scoped, tag = 'internal scratch']
  %s0 = inlined_call_operand.vmem [shape: f32[2,10,10,8], index: 0, kind: input, shape index: {}]
  %s1 = inlined_call_operand.vmem [shape: f32[1,8], index: 1, kind: input, shape index: {}]
  %s2 = inlined_call_operand.vmem [shape: f32[1,8], index: 2, kind: input, shape index: {}]
  %s3 = inlined_call_operand.vmem [shape: f32[9,8,8], index: 3, kind: input, shape index: {}]
  %s4 = inlined_call_operand.vmem [shape: f32[2,8,8,4], index: 4, kind: input, shape index: {}]
  %s5 = inlined_call_operand.vmem [shape: f32[4,8], index: 5, kind: input, shape index: {}]
  %s6 = inlined_call_operand.vmem [shape: f32[1,8], index: 6, kind: input, shape index: {}]
  %s7 = inlined_call_operand.vmem [shape: f32[2,8,8,8], index: 7, kind: output, shape index: {}]
  %s8 = sld [smem:[#allocation0]]
  $region68: #{res_block_forward.5} parent=0
    _
  %s10 = ssub.s32 1, %s8
  %s11 = scalar_select 0, %s10, %s8
  loop: start=0, step=1, limit=4
  $region2: #{res_block_forward.5} parent=0 // loop_pre_header
    _
  $region3: #{res_block_forward.5} parent=0 // loop_header
    %s13 = sphi 0, %s17
    %p14 = scmp.ge.s32.totalorder %s13, 4
    %s23 = sphi 0, %s25
    %s26 = sphi 0, %s23
    %s27 = sphi 0, %s26
    %s43 = sphi 0, %s27
    %s47 = sphi 0, %s47
    %s49 = sphi 0, %s47
    %s50 = sphi 0, %s49
    %s64 = sphi 0, %s50
    %s68 = sphi 0, %s68
    %s70 = sphi 0, %s68
    %s71 = sphi 0, %s70
    %s85 = sphi 0, %s71
    %s89 = sphi 0, %s89
    %s91 = sphi 0, %s89
    %s92 = sphi 0, %s91
    %s106 = sphi 0, %s92
    %s112 = sphi 0, %s114
    %s115 = sphi 0, %s112
    %s116 = sphi 0, %s115
    %s132 = sphi 0, %s116
    %s136 = sphi 0, %s136
    %s138 = sphi 0, %s136
    %s139 = sphi 0, %s138
    %s153 = sphi 0, %s139
    %s157 = sphi 0, %s157
    %s159 = sphi 0, %s157
    %s160 = sphi 0, %s159
    %s174 = sphi 0, %s160
    %s180 = sphi 0, %s182
    %s183 = sphi 0, %s180
    %s184 = sphi 0, %s183
    %s200 = sphi 0, %s184
  $region4: #{res_block_forward.5} parent=0 // loop_header_branch
    %16 = sbr.rel (%p14) target = $region8
  $region5: #{res_block_forward.5} parent=0 // loop_body
    %s18 = ssub.s32 %s13, 1
    %s19 = ssub.s32 %s13, 2
    %s20 = sadd.s32 %s13, 1
    %s21 = ssub.s32 %s13, %s20
    %p22 = scmp.eq.s32.totalorder %s21, 0
    %s24 = sadd.s32 %s23, 1
    %s25 = scalar_select %p22, %s23, %s24
    %p28 = pneg %p22
    %p29 = scmp.eq.s32.totalorder %s13, 1
    %p30 = por %p28, %p29
    %p31 = scmp.ne.s32.totalorder %s23, %s26
    %p32 = scmp.eq.s32.totalorder %s13, 0
    %p33 = por %p31, %p32
    %p34 = scmp.ne.s32.totalorder %s23, %s26
    %p35 = scmp.eq.s32.totalorder %s18, 1
    %p36 = por %p34, %p35
    %p37 = scmp.ne.s32.totalorder %s26, %s27
    %p38 = scmp.eq.s32.totalorder %s18, 0
    %p39 = por %p37, %p38
    %p40 = scmp.ne.s32.totalorder %s26, %s27
    %p41 = scmp.eq.s32.totalorder %s19, 1
    %p42 = por %p40, %p41
    %p44 = scmp.ne.s32.totalorder %s27, %s43
    %p45 = scmp.eq.s32.totalorder %s19, 0
    %p46 = por %p44, %p45
    %s48 = sadd.s32 %s47, 1
    %p51 = scmp.eq.s32.totalorder %s13, 1
    %p52 = scmp.ne.s32.totalorder %s47, %s49
    %p53 = scmp.eq.s32.totalorder %s13, 0
    %p54 = por %p52, %p53
    %p55 = scmp.ne.s32.totalorder %s47, %s49
    %p56 = scmp.eq.s32.totalorder %s18, 1
    %p57 = por %p55, %p56
    %p58 = scmp.ne.s32.totalorder %s49, %s50
    %p59 = scmp.eq.s32.totalorder %s18, 0
    %p60 = por %p58, %p59
    %p61 = scmp.ne.s32.totalorder %s49, %s50
    %p62 = scmp.eq.s32.totalorder %s19, 1
    %p63 = por %p61, %p62
    %p65 = scmp.ne.s32.totalorder %s50, %s64
    %p66 = scmp.eq.s32.totalorder %s19, 0
    %p67 = por %p65, %p66
    %s69 = sadd.s32 %s68, 1
    %p72 = scmp.eq.s32.totalorder %s13, 1
    %p73 = scmp.ne.s32.totalorder %s68, %s70
    %p74 = scmp.eq.s32.totalorder %s13, 0
    %p75 = por %p73, %p74
    %p76 = scmp.ne.s32.totalorder %s68, %s70
    %p77 = scmp.eq.s32.totalorder %s18, 1
    %p78 = por %p76, %p77
    %p79 = scmp.ne.s32.totalorder %s70, %s71
    %p80 = scmp.eq.s32.totalorder %s18, 0
    %p81 = por %p79, %p80
    %p82 = scmp.ne.s32.totalorder %s70, %s71
    %p83 = scmp.eq.s32.totalorder %s19, 1
    %p84 = por %p82, %p83
    %p86 = scmp.ne.s32.totalorder %s71, %s85
    %p87 = scmp.eq.s32.totalorder %s19, 0
    %p88 = por %p86, %p87
    %s90 = sadd.s32 %s89, 1
    %p93 = scmp.eq.s32.totalorder %s13, 1
    %p94 = scmp.ne.s32.totalorder %s89, %s91
    %p95 = scmp.eq.s32.totalorder %s13, 0
    %p96 = por %p94, %p95
    %p97 = scmp.ne.s32.totalorder %s89, %s91
    %p98 = scmp.eq.s32.totalorder %s18, 1
    %p99 = por %p97, %p98
    %p100 = scmp.ne.s32.totalorder %s91, %s92
    %p101 = scmp.eq.s32.totalorder %s18, 0
    %p102 = por %p100, %p101
    %p103 = scmp.ne.s32.totalorder %s91, %s92
    %p104 = scmp.eq.s32.totalorder %s19, 1
    %p105 = por %p103, %p104
    %p107 = scmp.ne.s32.totalorder %s92, %s106
    %p108 = scmp.eq.s32.totalorder %s19, 0
    %p109 = por %p107, %p108
    %s110 = ssub.s32 %s13, %s20
    %p111 = scmp.eq.s32.totalorder %s110, 0
    %s113 = sadd.s32 %s112, 1
    %s114 = scalar_select %p111, %s112, %s113
    %p117 = pneg %p111
    %p118 = scmp.eq.s32.totalorder %s13, 1
    %p119 = por %p117, %p118
    %p120 = scmp.ne.s32.totalorder %s112, %s115
    %p121 = scmp.eq.s32.totalorder %s13, 0
    %p122 = por %p120, %p121
    %p123 = scmp.ne.s32.totalorder %s112, %s115
    %p124 = scmp.eq.s32.totalorder %s18, 1
    %p125 = por %p123, %p124
    %p126 = scmp.ne.s32.totalorder %s115, %s116
    %p127 = scmp.eq.s32.totalorder %s18, 0
    %p128 = por %p126, %p127
    %p129 = scmp.ne.s32.totalorder %s115, %s116
    %p130 = scmp.eq.s32.totalorder %s19, 1
    %p131 = por %p129, %p130
    %p133 = scmp.ne.s32.totalorder %s116, %s132
    %p134 = scmp.eq.s32.totalorder %s19, 0
    %p135 = por %p133, %p134
    %s137 = sadd.s32 %s136, 1
    %p140 = scmp.eq.s32.totalorder %s13, 1
    %p141 = scmp.ne.s32.totalorder %s136, %s138
    %p142 = scmp.eq.s32.totalorder %s13, 0
    %p143 = por %p141, %p142
    %p144 = scmp.ne.s32.totalorder %s136, %s138
    %p145 = scmp.eq.s32.totalorder %s18, 1
    %p146 = por %p144, %p145
    %p147 = scmp.ne.s32.totalorder %s138, %s139
    %p148 = scmp.eq.s32.totalorder %s18, 0
    %p149 = por %p147, %p148
    %p150 = scmp.ne.s32.totalorder %s138, %s139
    %p151 = scmp.eq.s32.totalorder %s19, 1
    %p152 = por %p150, %p151
    %p154 = scmp.ne.s32.totalorder %s139, %s153
    %p155 = scmp.eq.s32.totalorder %s19, 0
    %p156 = por %p154, %p155
    %s158 = sadd.s32 %s157, 1
    %p161 = scmp.eq.s32.totalorder %s13, 1
    %p162 = scmp.ne.s32.totalorder %s157, %s159
    %p163 = scmp.eq.s32.totalorder %s13, 0
    %p164 = por %p162, %p163
    %p165 = scmp.ne.s32.totalorder %s157, %s159
    %p166 = scmp.eq.s32.totalorder %s18, 1
    %p167 = por %p165, %p166
    %p168 = scmp.ne.s32.totalorder %s159, %s160
    %p169 = scmp.eq.s32.totalorder %s18, 0
    %p170 = por %p168, %p169
    %p171 = scmp.ne.s32.totalorder %s159, %s160
    %p172 = scmp.eq.s32.totalorder %s19, 1
    %p173 = por %p171, %p172
    %p175 = scmp.ne.s32.totalorder %s160, %s174
    %p176 = scmp.eq.s32.totalorder %s19, 0
    %p177 = por %p175, %p176
    %s178 = ssub.s32 %s13, %s20
    %p179 = scmp.eq.s32.totalorder %s178, 0
    %s181 = sadd.s32 %s180, 1
    %s182 = scalar_select %p179, %s180, %s181
    %p185 = pneg %p179
    %p186 = scmp.eq.s32.totalorder %s13, 1
    %p187 = por %p185, %p186
    %p188 = scmp.ne.s32.totalorder %s180, %s183
    %p189 = scmp.eq.s32.totalorder %s13, 0
    %p190 = por %p188, %p189
    %p191 = scmp.ne.s32.totalorder %s180, %s183
    %p192 = scmp.eq.s32.totalorder %s18, 1
    %p193 = por %p191, %p192
    %p194 = scmp.ne.s32.totalorder %s183, %s184
    %p195 = scmp.eq.s32.totalorder %s18, 0
    %p196 = por %p194, %p195
    %p197 = scmp.ne.s32.totalorder %s183, %s184
    %p198 = scmp.eq.s32.totalorder %s19, 1
    %p199 = por %p197, %p198
    %p201 = scmp.ne.s32.totalorder %s184, %s200
    %p202 = scmp.eq.s32.totalorder %s19, 0
    %p203 = por %p201, %p202
    %p204 = scmp.le.s32.totalorder 1, %s13
    %p205 = scmp.lt.s32.totalorder %s13, 3
    %p206 = pnand %p204, %p205
    %p207 = pneg %p206
    // Predicated region
    $region9: #{res_block_forward.5} parent=5 // pred_check
      _
    $region10: #{res_block_forward.5} parent=5 // pred_check_branch
      %209 = sbr.rel (%p206) target = $region12
    $region11: #{res_block_forward.5} parent=5 // pred_region
      %s210 = ssub.s32 %s13, 1
      // Predicated region
      $region13: #{res_block_forward.5} parent=11 // pred_check
        %p211 = pneg %p60
      $region14: #{res_block_forward.5} parent=11 // pred_check_branch
        %213 = sbr.rel (%p211) target = $region16
      $region15: #{res_block_forward.5} parent=11 // pred_region
        _
      $region16: #{res_block_forward.5} parent=11 // pred_fallthru
        _
      // Predicated region
      $region17: #{res_block_forward.5} parent=11 // pred_check
        %p214 = pneg %p81
      $region18: #{res_block_forward.5} parent=11 // pred_check_branch
        %216 = sbr.rel (%p214) target = $region20
      $region19: #{res_block_forward.5} parent=11 // pred_region
        _
      $region20: #{res_block_forward.5} parent=11 // pred_fallthru
        _
      // Predicated region
      $region21: #{res_block_forward.5} parent=11 // pred_check
        %p217 = pneg %p102
      $region22: #{res_block_forward.5} parent=11 // pred_check_branch
        %219 = sbr.rel (%p217) target = $region24
      $region23: #{res_block_forward.5} parent=11 // pred_region
        _
      $region24: #{res_block_forward.5} parent=11 // pred_fallthru
        _
      // Predicated region
      $region25: #{res_block_forward.5} parent=11 // pred_check
        %p220 = pneg %p149
      $region26: #{res_block_forward.5} parent=11 // pred_check_branch
        %222 = sbr.rel (%p220) target = $region28
      $region27: #{res_block_forward.5} parent=11 // pred_region
        _
      $region28: #{res_block_forward.5} parent=11 // pred_fallthru
        _
      // Predicated region
      $region29: #{res_block_forward.5} parent=11 // pred_check
        %p223 = pneg %p170
      $region30: #{res_block_forward.5} parent=11 // pred_check_branch
        %225 = sbr.rel (%p223) target = $region32
      $region31: #{res_block_forward.5} parent=11 // pred_region
        _
      $region32: #{res_block_forward.5} parent=11 // pred_fallthru
        _
    $region12: #{res_block_forward.5} parent=5 // pred_fallthru
      _
    %p226 = scmp.lt.s32.totalorder %s13, 2
    // Predicated region
    $region33: #{res_block_forward.5} parent=5 // pred_check
      %p227 = pneg %p226
    $region34: #{res_block_forward.5} parent=5 // pred_check_branch
      %229 = sbr.rel (%p227) target = $region36
    $region35: #{res_block_forward.5} parent=5 // pred_region
      // Predicated region
      $region37: #{res_block_forward.5} parent=35 // pred_check
        %p230 = pneg %p33
      $region38: #{res_block_forward.5} parent=35 // pred_check_branch
        %232 = sbr.rel (%p230) target = $region40
      $region39: #{res_block_forward.5} parent=35 // pred_region
        %p233 = scmp.lt.s32.totalorder %s13, 1
        %s234 = scalar_select %p233, %s13, 1
        %s235 = smul.addr %s234, 20
        %s236 = smul.addr %s235, 8
        %s237 = scalar_lea.vmem %s0, %s236
      $region40: #{res_block_forward.5} parent=35 // pred_fallthru
        _
      // Predicated region
      $region41: #{res_block_forward.5} parent=35 // pred_check
        %p238 = pneg %p122
      $region42: #{res_block_forward.5} parent=35 // pred_check_branch
        %240 = sbr.rel (%p238) target = $region44
      $region43: #{res_block_forward.5} parent=35 // pred_region
        %p241 = scmp.lt.s32.totalorder %s13, 1
        %s242 = scalar_select %p241, %s13, 1
        %s243 = smul.addr %s242, 8
        %s244 = smul.addr %s243, 8
        %s245 = scalar_lea.vmem %s4, %s244
      $region44: #{res_block_forward.5} parent=35 // pred_fallthru
        _
    $region36: #{res_block_forward.5} parent=5 // pred_fallthru
      _
    %p246 = scmp.le.s32.totalorder 1, %s13
    %p247 = scmp.lt.s32.totalorder %s13, 3
    %p248 = pnand %p246, %p247
    %p249 = pneg %p248
    // Predicated region
    $region45: #{res_block_forward.5} parent=5 // pred_check
      _
    $region46: #{res_block_forward.5} parent=5 // pred_check_branch
      %251 = sbr.rel (%p248) target = $region48
    $region47: #{res_block_forward.5} parent=5 // pred_region
      %s252 = ssub.s32 %s13, 1
      %p253 = scmp.lt.s32.totalorder %s18, 1
      %s254 = scalar_select %p253, %s18, 1
      %s255 = smul.addr %s254, 20
      %s256 = smul.addr %s255, 8
      %s257 = scalar_lea.vmem %s0, %s256
      %p258 = pneg %p39
      %p259 = pneg %p36
      %p260 = pneg %p60
      %p261 = pneg %p57
      %p262 = pneg %p81
      %p263 = pneg %p78
      %p264 = pneg %p102
      %p265 = pneg %p99
      %p266 = scmp.lt.s32.totalorder %s18, 1
      %s267 = scalar_select %p266, %s18, 1
      %s268 = smul.addr %s267, 8
      %s269 = smul.addr %s268, 8
      %s270 = scalar_lea.vmem %s4, %s269
      %p271 = pneg %p128
      %p272 = pneg %p125
      %p273 = pneg %p149
      %p274 = pneg %p146
      %p275 = pneg %p170
      %p276 = pneg %p167
      %p277 = pneg %p196
      %p278 = pneg %p193
      %p279 = scmp.lt.s32.totalorder %s18, 1
      %s280 = scalar_select %p279, %s18, 1
      %s281 = smul.addr %s280, 8
      %s282 = smul.addr %s281, 8
      %s283 = scalar_lea.vmem %s7, %s282
      %p284 = scmp.lt.s32.totalorder %s18, 1
      %s285 = scalar_select %p284, %s18, 1
      %s286 = smul.addr %s285, 20
      %s287 = smul.addr %s286, 8
      %s288 = scalar_lea.vmem %s0, %s287
      %p289 = scmp.lt.s32.totalorder %s18, 1
      %s290 = scalar_select %p289, %s18, 1
      %s291 = smul.addr %s290, 8
      %s292 = smul.addr %s291, 8
      %s293 = scalar_lea.vmem %s4, %s292
      %p294 = scmp.lt.s32.totalorder %s18, 1
      %s295 = scalar_select %p294, %s18, 1
      %s296 = smul.addr %s295, 8
      %s297 = smul.addr %s296, 8
      %s298 = scalar_lea.vmem %s7, %s297
      %v299 = vld [vmem:[%s1] sm:$0x1]
      %v300 = vld [vmem:[%s2] sm:$0x1]
      %v301 = vld [vmem:[%s6] sm:$0x1]
      %v302 = vld [vmem:[%s3] sm:$0xff]
      %v303 = vld [vmem:[%s3 + $0x8] sm:$0xff]
      %v304 = vld [vmem:[%s3 + $0x10] sm:$0xff]
      %v305 = vld [vmem:[%s3 + $0x18] sm:$0xff]
      %v306 = vld [vmem:[%s3 + $0x20] sm:$0xff]
      %v307 = vld [vmem:[%s3 + $0x28] sm:$0xff]
      %v308 = vld [vmem:[%s3 + $0x30] sm:$0xff]
      %v309 = vld [vmem:[%s3 + $0x38] sm:$0xff]
      %v310 = vld [vmem:[%s3 + $0x40] sm:$0xff]
      %v311 = vld [vmem:[%s5] sm:$0xf]
      loop: start=0, step=1, limit=8
      $region49: #{res_block_forward.5} parent=47 // loop_pre_header
        _
      $region50: #{res_block_forward.5} parent=47 // loop_header
        %s313 = sphi 0, %s317
        %p314 = scmp.ge.s32.totalorder %s313, 8
      $region51: #{res_block_forward.5} parent=47 // loop_header_branch
        %316 = sbr.rel (%p314) target = $region55
      $region52: #{res_block_forward.5} parent=47 // loop_body
        %s318 = smul.u32 %s313, 8
        %s319 = scalar_lea.vmem %s293, %s318
        %v320 = vld [vmem:[%s319] sm:$0xff]
        %s321 = smul.u32 %s313, 16
        %s322 = scalar_lea.vmem %s288, %s321
        %v323 = vld [vmem:[%s322] sm:$0xff]
        %v325 = vperm.slane %v299, 0
        %v327 = vmul.f32 %v323, %v325
        %v329 = vperm.slane %v300, 0
        %v331 = vadd.f32 %v327, %v329
        %v332 = vmax.f32 %v331, 0.0
        %vm333 = vcmask 64512
        %v335 = vsel %vm333, %v332, 0
        %337 = vmatpush.msra.mxu0 0.0
        %338 = vmatpush.msra.mxu0 0.0
        %339 = vmatpush.msra.mxu0 0.0
        %340 = vmatpush.msra.mxu0 0.0
        %341 = vmatpush.msra.mxu0 0.0
        %342 = vmatpush.msra.mxu0 0.0
        %343 = vmatpush.msra.mxu0 0.0
        %344 = vmatpush.msra.mxu0 0.0
        %345 = vmatpush.msra.mxu0 0.0
        %346 = vmatpush.msra.mxu0 0.0
        %347 = vmatpush.msra.mxu0 0.0
        %348 = vmatpush.msra.mxu0 0.0
        %349 = vmatpush.msra.mxu0 0.0
        %350 = vmatpush.msra.mxu0 0.0
        %351 = vmatpush.msra.mxu0 0.0
        %352 = vmatpush.msra.mxu0 %v302
        %353 = vmatmul.f32.gmra.mxu0 %v335
        %v354 = vpop.f32.mrf.mxu0
        %v355 = vadd.f32 0.0, %v354
        %356 = vdwg.mxu0
        %vm357 = vcmask 31744
        %v359 = vsel %vm357, %v320, 0
        %vm361 = vcmask 1043456
        %v363 = vsel %vm361, %v311, 0
        %365 = vmatpush.msra.mxu0 0.0
        %366 = vmatpush.msra.mxu0 0.0
        %367 = vmatpush.msra.mxu0 0.0
        %368 = vmatpush.msra.mxu0 0.0
        %369 = vmatpush.msra.mxu0 0.0
        %370 = vmatpush.msra.mxu0 0.0
        %371 = vmatpush.msra.mxu0 0.0
        %372 = vmatpush.msra.mxu0 0.0
        %373 = vmatpush.msra.mxu0 0.0
        %374 = vmatpush.msra.mxu0 0.0
        %375 = vmatpush.msra.mxu0 0.0
        %376 = vmatpush.msra.mxu0 0.0
        %377 = vmatpush.msra.mxu0 0.0
        %378 = vmatpush.msra.mxu0 0.0
        %379 = vmatpush.msra.mxu0 0.0
        %380 = vmatpush.msra.mxu0 %v363
        %381 = vmatmul.f32.gmra.mxu0 %v359
        %v382 = vpop.f32.mrf.mxu0
        %v383 = vadd.f32 %v355, %v382
        %384 = vdwg.mxu0
        %v385 = vld [vmem:[%s322 + $0x1] sm:$0xff]
        %v386 = vmul.f32 %v385, %v325
        %v387 = vadd.f32 %v386, %v329
        %v388 = vmax.f32 %v387, 0.0
        %v390 = vsel %vm333, %v388, 0
        %392 = vmatpush.msra.mxu0 0.0
        %393 = vmatpush.msra.mxu0 0.0
        %394 = vmatpush.msra.mxu0 0.0
        %395 = vmatpush.msra.mxu0 0.0
        %396 = vmatpush.msra.mxu0 0.0
        %397 = vmatpush.msra.mxu0 0.0
        %398 = vmatpush.msra.mxu0 0.0
        %399 = vmatpush.msra.mxu0 0.0
        %400 = vmatpush.msra.mxu0 0.0
        %401 = vmatpush.msra.mxu0 0.0
        %402 = vmatpush.msra.mxu0 0.0
        %403 = vmatpush.msra.mxu0 0.0
        %404 = vmatpush.msra.mxu0 0.0
        %405 = vmatpush.msra.mxu0 0.0
        %406 = vmatpush.msra.mxu0 0.0
        %407 = vmatpush.msra.mxu0 %v303
        %408 = vmatmul.f32.gmra.mxu0 %v390
        %v409 = vpop.f32.mrf.mxu0
        %v410 = vadd.f32 0.0, %v409
        %411 = vdwg.mxu0
        %v412 = vadd.f32 %v383, %v410
        %v413 = vld [vmem:[%s322 + $0x2] sm:$0xff]
        %v414 = vmul.f32 %v413, %v325
        %v415 = vadd.f32 %v414, %v329
        %v416 = vmax.f32 %v415, 0.0
        %v418 = vsel %vm333, %v416, 0
        %420 = vmatpush.msra.mxu0 0.0
        %421 = vmatpush.msra.mxu0 0.0
        %422 = vmatpush.msra.mxu0 0.0
        %423 = vmatpush.msra.mxu0 0.0
        %424 = vmatpush.msra.mxu0 0.0
        %425 = vmatpush.msra.mxu0 0.0
        %426 = vmatpush.msra.mxu0 0.0
        %427 = vmatpush.msra.mxu0 0.0
        %428 = vmatpush.msra.mxu0 0.0
        %429 = vmatpush.msra.mxu0 0.0
        %430 = vmatpush.msra.mxu0 0.0
        %431 = vmatpush.msra.mxu0 0.0
        %432 = vmatpush.msra.mxu0 0.0
        %433 = vmatpush.msra.mxu0 0.0
        %434 = vmatpush.msra.mxu0 0.0
        %435 = vmatpush.msra.mxu0 %v304
        %436 = vmatmul.f32.gmra.mxu0 %v418
        %v437 = vpop.f32.mrf.mxu0
        %v438 = vadd.f32 0.0, %v437
        %439 = vdwg.mxu0
        %v440 = vadd.f32 %v412, %v438
        %s441 = sadd.s32 %s313, 1
        %s442 = smul.u32 %s441, 16
        %s443 = scalar_lea.vmem %s288, %s442
        %v444 = vld [vmem:[%s443] sm:$0xff]
        %v445 = vmul.f32 %v444, %v325
        %v446 = vadd.f32 %v445, %v329
        %v447 = vmax.f32 %v446, 0.0
        %v449 = vsel %vm333, %v447, 0
        %451 = vmatpush.msra.mxu0 0.0
        %452 = vmatpush.msra.mxu0 0.0
        %453 = vmatpush.msra.mxu0 0.0
        %454 = vmatpush.msra.mxu0 0.0
        %455 = vmatpush.msra.mxu0 0.0
        %456 = vmatpush.msra.mxu0 0.0
        %457 = vmatpush.msra.mxu0 0.0
        %458 = vmatpush.msra.mxu0 0.0
        %459 = vmatpush.msra.mxu0 0.0
        %460 = vmatpush.msra.mxu0 0.0
        %461 = vmatpush.msra.mxu0 0.0
        %462 = vmatpush.msra.mxu0 0.0
        %463 = vmatpush.msra.mxu0 0.0
        %464 = vmatpush.msra.mxu0 0.0
        %465 = vmatpush.msra.mxu0 0.0
        %466 = vmatpush.msra.mxu0 %v305
        %467 = vmatmul.f32.gmra.mxu0 %v449
        %v468 = vpop.f32.mrf.mxu0
        %v469 = vadd.f32 0.0, %v468
        %470 = vdwg.mxu0
        %v471 = vadd.f32 %v440, %v469
        %v472 = vld [vmem:[%s443 + $0x1] sm:$0xff]
        %v473 = vmul.f32 %v472, %v325
        %v474 = vadd.f32 %v473, %v329
        %v475 = vmax.f32 %v474, 0.0
        %v477 = vsel %vm333, %v475, 0
        %479 = vmatpush.msra.mxu0 0.0
        %480 = vmatpush.msra.mxu0 0.0
        %481 = vmatpush.msra.mxu0 0.0
        %482 = vmatpush.msra.mxu0 0.0
        %483 = vmatpush.msra.mxu0 0.0
        %484 = vmatpush.msra.mxu0 0.0
        %485 = vmatpush.msra.mxu0 0.0
        %486 = vmatpush.msra.mxu0 0.0
        %487 = vmatpush.msra.mxu0 0.0
        %488 = vmatpush.msra.mxu0 0.0
        %489 = vmatpush.msra.mxu0 0.0
        %490 = vmatpush.msra.mxu0 0.0
        %491 = vmatpush.msra.mxu0 0.0
        %492 = vmatpush.msra.mxu0 0.0
        %493 = vmatpush.msra.mxu0 0.0
        %494 = vmatpush.msra.mxu0 %v306
        %495 = vmatmul.f32.gmra.mxu0 %v477
        %v496 = vpop.f32.mrf.mxu0
        %v497 = vadd.f32 0.0, %v496
        %498 = vdwg.mxu0
        %v499 = vadd.f32 %v471, %v497
        %v500 = vld [vmem:[%s443 + $0x2] sm:$0xff]
        %v501 = vmul.f32 %v500, %v325
        %v502 = vadd.f32 %v501, %v329
        %v503 = vmax.f32 %v502, 0.0
        %v505 = vsel %vm333, %v503, 0
        %507 = vmatpush.msra.mxu0 0.0
        %508 = vmatpush.msra.mxu0 0.0
        %509 = vmatpush.msra.mxu0 0.0
        %510 = vmatpush.msra.mxu0 0.0
        %511 = vmatpush.msra.mxu0 0.0
        %512 = vmatpush.msra.mxu0 0.0
        %513 = vmatpush.msra.mxu0 0.0
        %514 = vmatpush.msra.mxu0 0.0
        %515 = vmatpush.msra.mxu0 0.0
        %516 = vmatpush.msra.mxu0 0.0
        %517 = vmatpush.msra.mxu0 0.0
        %518 = vmatpush.msra.mxu0 0.0
        %519 = vmatpush.msra.mxu0 0.0
        %520 = vmatpush.msra.mxu0 0.0
        %521 = vmatpush.msra.mxu0 0.0
        %522 = vmatpush.msra.mxu0 %v307
        %523 = vmatmul.f32.gmra.mxu0 %v505
        %v524 = vpop.f32.mrf.mxu0
        %v525 = vadd.f32 0.0, %v524
        %526 = vdwg.mxu0
        %v527 = vadd.f32 %v499, %v525
        %s528 = sadd.s32 %s313, 2
        %s529 = smul.u32 %s528, 16
        %s530 = scalar_lea.vmem %s288, %s529
        %v531 = vld [vmem:[%s530] sm:$0xff]
        %v532 = vmul.f32 %v531, %v325
        %v533 = vadd.f32 %v532, %v329
        %v534 = vmax.f32 %v533, 0.0
        %v536 = vsel %vm333, %v534, 0
        %538 = vmatpush.msra.mxu0 0.0
        %539 = vmatpush.msra.mxu0 0.0
        %540 = vmatpush.msra.mxu0 0.0
        %541 = vmatpush.msra.mxu0 0.0
        %542 = vmatpush.msra.mxu0 0.0
        %543 = vmatpush.msra.mxu0 0.0
        %544 = vmatpush.msra.mxu0 0.0
        %545 = vmatpush.msra.mxu0 0.0
        %546 = vmatpush.msra.mxu0 0.0
        %547 = vmatpush.msra.mxu0 0.0
        %548 = vmatpush.msra.mxu0 0.0
        %549 = vmatpush.msra.mxu0 0.0
        %550 = vmatpush.msra.mxu0 0.0
        %551 = vmatpush.msra.mxu0 0.0
        %552 = vmatpush.msra.mxu0 0.0
        %553 = vmatpush.msra.mxu0 %v308
        %554 = vmatmul.f32.gmra.mxu0 %v536
        %v555 = vpop.f32.mrf.mxu0
        %v556 = vadd.f32 0.0, %v555
        %557 = vdwg.mxu0
        %v558 = vadd.f32 %v527, %v556
        %v559 = vld [vmem:[%s530 + $0x1] sm:$0xff]
        %v560 = vmul.f32 %v559, %v325
        %v561 = vadd.f32 %v560, %v329
        %v562 = vmax.f32 %v561, 0.0
        %v564 = vsel %vm333, %v562, 0
        %566 = vmatpush.msra.mxu0 0.0
        %567 = vmatpush.msra.mxu0 0.0
        %568 = vmatpush.msra.mxu0 0.0
        %569 = vmatpush.msra.mxu0 0.0
        %570 = vmatpush.msra.mxu0 0.0
        %571 = vmatpush.msra.mxu0 0.0
        %572 = vmatpush.msra.mxu0 0.0
        %573 = vmatpush.msra.mxu0 0.0
        %574 = vmatpush.msra.mxu0 0.0
        %575 = vmatpush.msra.mxu0 0.0
        %576 = vmatpush.msra.mxu0 0.0
        %577 = vmatpush.msra.mxu0 0.0
        %578 = vmatpush.msra.mxu0 0.0
        %579 = vmatpush.msra.mxu0 0.0
        %580 = vmatpush.msra.mxu0 0.0
        %581 = vmatpush.msra.mxu0 %v309
        %582 = vmatmul.f32.gmra.mxu0 %v564
        %v583 = vpop.f32.mrf.mxu0
        %v584 = vadd.f32 0.0, %v583
        %585 = vdwg.mxu0
        %v586 = vadd.f32 %v558, %v584
        %v587 = vld [vmem:[%s530 + $0x2] sm:$0xff]
        %v588 = vmul.f32 %v587, %v325
        %v589 = vadd.f32 %v588, %v329
        %v590 = vmax.f32 %v589, 0.0
        %v592 = vsel %vm333, %v590, 0
        %594 = vmatpush.msra.mxu0 0.0
        %595 = vmatpush.msra.mxu0 0.0
        %596 = vmatpush.msra.mxu0 0.0
        %597 = vmatpush.msra.mxu0 0.0
        %598 = vmatpush.msra.mxu0 0.0
        %599 = vmatpush.msra.mxu0 0.0
        %600 = vmatpush.msra.mxu0 0.0
        %601 = vmatpush.msra.mxu0 0.0
        %602 = vmatpush.msra.mxu0 0.0
        %603 = vmatpush.msra.mxu0 0.0
        %604 = vmatpush.msra.mxu0 0.0
        %605 = vmatpush.msra.mxu0 0.0
        %606 = vmatpush.msra.mxu0 0.0
        %607 = vmatpush.msra.mxu0 0.0
        %608 = vmatpush.msra.mxu0 0.0
        %609 = vmatpush.msra.mxu0 %v310
        %610 = vmatmul.f32.gmra.mxu0 %v592
        %v611 = vpop.f32.mrf.mxu0
        %v612 = vadd.f32 0.0, %v611
        %613 = vdwg.mxu0
        %v614 = vadd.f32 %v586, %v612
        %v616 = vperm.slane %v301, 0
        %v618 = vadd.f32 %v614, %v616
        %s619 = scalar_lea.vmem %s298, %s318
        %620 = vst.msk [vmem:[%s619] sm:$0xff] %vm333, %v618
      $region53: #{res_block_forward.5} parent=47 // loop_footer
        %s317 = sadd.s32 1, %s313
      $region54: #{res_block_forward.5} parent=47 // loop_footer_branch
        %312 = sbr.rel target = $region50
      $region55: #{res_block_forward.5} parent=47 // loop_exit
        _
      %p621 = scmp.lt.s32.totalorder %s18, 1
      %s622 = scalar_select %p621, %s18, 1
      %s623 = smul.addr %s622, 8
      %s624 = smul.addr %s623, 8
      %s625 = scalar_lea.vmem %s7, %s624
      // Predicated region
      $region56: #{res_block_forward.5} parent=47 // pred_check
        %p626 = pneg %p193
      $region57: #{res_block_forward.5} parent=47 // pred_check_branch
        %628 = sbr.rel (%p626) target = $region59
      $region58: #{res_block_forward.5} parent=47 // pred_region
        _
      $region59: #{res_block_forward.5} parent=47 // pred_fallthru
        _
    $region48: #{res_block_forward.5} parent=5 // pred_fallthru
      _
    %p629 = scmp.le.s32.totalorder 2, %s13
    // Predicated region
    $region60: #{res_block_forward.5} parent=5 // pred_check
      %p630 = pneg %p629
    $region61: #{res_block_forward.5} parent=5 // pred_check_branch
      %632 = sbr.rel (%p630) target = $region63
    $region62: #{res_block_forward.5} parent=5 // pred_region
      %s633 = ssub.s32 %s13, 2
      // Predicated region
      $region64: #{res_block_forward.5} parent=62 // pred_check
        %p634 = pneg %p199
      $region65: #{res_block_forward.5} parent=62 // pred_check_branch
        %636 = sbr.rel (%p634) target = $region67
      $region66: #{res_block_forward.5} parent=62 // pred_region
        %p637 = scmp.lt.s32.totalorder %s19, 1
        %s638 = scalar_select %p637, %s19, 1
        %s639 = smul.addr %s638, 8
        %s640 = smul.addr %s639, 8
        %s641 = scalar_lea.vmem %s7, %s640
      $region67: #{res_block_forward.5} parent=62 // pred_fallthru
        _
    $region63: #{res_block_forward.5} parent=5 // pred_fallthru
      _
  $region6: #{res_block_forward.5} parent=0 // loop_footer
    %s17 = sadd.s32 1, %s13
  $region7: #{res_block_forward.5} parent=0 // loop_footer_branch
    %12 = sbr.rel target = $region3
  $region8: #{res_block_forward.5} parent=0 // loop_exit
    _

</llo_original>
